<compile_context>
chip_gen: v7x
topology: tpu7x:2x2x1
jax: 0.10.0
libtpu: 0.0.40
codegen_flags: <defaults>
</compile_context>

<pallas_src>
import jax
import jax.numpy as jnp
from jax.experimental import pallas as pl
from jax.experimental.pallas import tpu as pltpu

IN_DIM = 28 * 28      # 784 (full-extent K block; 784 % 128 != 0 is fine)
HID = 512
OUT = 10
OUT_PAD = 128         # lane-dense output width (unmasked vst, clean MXU tile)
TB_MAX = 512          # max batch-tile rows (amortizes ~0.35us/grid-step overhead)


def _round_up(x, m):
    return ((x + m - 1) // m) * m


def _choose_batch_tiling(B, tb_max=TB_MAX):
    """Pick (tile_rows, num_tiles, padded_batch).

    - batch padded only to a multiple of 16 (not 128/256) -> tiny batches stay tiny
    - tile rows are sublane (8) aligned
    - always >= 2 grid steps so v7x's 2nd TensorCore can be used ("parallel" axis)
    """
    b16 = max(_round_up(B, 16), 16)
    n = -(-b16 // tb_max)          # min #tiles with tile <= tb_max
    if n == 1:
        n = 2                      # split one tile into two for the 2nd TC
    tb = _round_up(-(-b16 // n), 8)
    return tb, n, tb * n


def mlp_kernel(x_ref, w1_ref, b1_ref, w2_ref, b2_ref, w3_ref, b3_ref, o_ref):
    # x tile is f32 (tb, 784); cast to bf16 in-kernel (no extra HBM pass).
    x = x_ref[...].astype(jnp.bfloat16)
    # Layer 1: (tb,784)bf16 @ (784,512)bf16 -> f32 acc, +b1, ReLU
    h1 = jnp.dot(x, w1_ref[...], preferred_element_type=jnp.float32)
    h1 = jnp.maximum(h1 + b1_ref[...], 0.0)
    # Layer 2: (tb,512)bf16 @ (512,512)bf16 -> f32 acc, +b2, ReLU
    h2 = jnp.dot(h1.astype(jnp.bfloat16), w2_ref[...],
                 preferred_element_type=jnp.float32)
    h2 = jnp.maximum(h2 + b2_ref[...], 0.0)
    # Output: (tb,512)bf16 @ (512,128)bf16 -> f32 acc, +b3 (padded cols stay 0)
    logits = jnp.dot(h2.astype(jnp.bfloat16), w3_ref[...],
                     preferred_element_type=jnp.float32)
    o_ref[...] = (logits + b3_ref[...]).astype(o_ref.dtype)


def prepare_params(params):
    """One-time parameter prep (do this ONCE, reuse across every forward call):
    cast weights (stored as (in, out), i.e. PyTorch W.T) to bf16 and pad the
    10-wide output layer to lane-dense 128 columns."""
    w1, b1, w2, b2, w3, b3 = params
    w1_bf = w1.astype(jnp.bfloat16)                          # (784, 512)
    w2_bf = w2.astype(jnp.bfloat16)                          # (512, 512)
    w3_pad = jnp.zeros((HID, OUT_PAD), jnp.bfloat16).at[:, :OUT].set(
        w3.astype(jnp.bfloat16))                             # (512, 128)
    b3_pad = jnp.zeros((1, OUT_PAD), jnp.float32).at[:, :OUT].set(b3)
    return (w1_bf, b1, w2_bf, b2, w3_pad, b3_pad)


def neural_network_forward(x_nchw, prepped_params):
    """x_nchw: (B, 1, 28, 28) float32 -> logits (B, 10) float32."""
    w1_bf, b1, w2_bf, b2, w3_pad, b3_pad = prepped_params
    B = x_nchw.shape[0]

    # nn.Flatten(): flatten everything but batch. Stays f32; bf16 cast is in-kernel.
    x = x_nchw.reshape(B, -1)

    tb, n_tiles, b_pad = _choose_batch_tiling(B)
    if b_pad != B:
        # Small row-pad only (multiple of 16 rows); padded rows are sliced away.
        x = jnp.zeros((b_pad, IN_DIM), x.dtype).at[:B].set(x)

    out = pl.pallas_call(
        mlp_kernel,
        out_shape=jax.ShapeDtypeStruct((b_pad, OUT_PAD), jnp.float32),
        grid_spec=pltpu.PrefetchScalarGridSpec(
            num_scalar_prefetch=0,
            grid=(n_tiles,),
            in_specs=[
                pl.BlockSpec((tb, IN_DIM), lambda i: (i, 0)),     # x tile (f32, streamed)
                pl.BlockSpec((IN_DIM, HID), lambda i: (0, 0)),    # W1^T bf16 (resident)
                pl.BlockSpec((1, HID), lambda i: (0, 0)),         # b1 f32
                pl.BlockSpec((HID, HID), lambda i: (0, 0)),       # W2^T bf16 (resident)
                pl.BlockSpec((1, HID), lambda i: (0, 0)),         # b2 f32
                pl.BlockSpec((HID, OUT_PAD), lambda i: (0, 0)),   # W3^T padded bf16
                pl.BlockSpec((1, OUT_PAD), lambda i: (0, 0)),     # b3 padded f32
            ],
            out_specs=pl.BlockSpec((tb, OUT_PAD), lambda i: (i, 0)),
        ),
        compiler_params=pltpu.CompilerParams(
            dimension_semantics=("parallel",),   # >=2 grid steps -> shards on v7x
        ),
    )(x, w1_bf, b1, w2_bf, b2, w3_pad, b3_pad)

    # Strip batch-row and output-lane padding.
    return out[:B, :OUT]


def init_params(key):
    """Deterministic init mimicking nn.Linear's U(-1/sqrt(fan_in), 1/sqrt(fan_in)).
    Weights are stored transposed, i.e. shape (in, out)."""
    k1, k2, k3, k4, k5, k6 = jax.random.split(key, 6)

    def lin(kw, kb, fan_in, fan_out):
        bound = 1.0 / jnp.sqrt(fan_in)
        w = jax.random.uniform(kw, (fan_in, fan_out), jnp.float32, -bound, bound)
        b = jax.random.uniform(kb, (1, fan_out), jnp.float32, -bound, bound)
        return w, b

    w1, b1 = lin(k1, k2, IN_DIM, HID)
    w2, b2 = lin(k3, k4, HID, HID)
    w3, b3 = lin(k5, k6, HID, OUT)
    return (w1, b1, w2, b2, w3, b3)


def _reference_bf16(x_nchw, params):
    """Plain-JAX reference with the same bf16 operands / f32 accumulation."""
    w1, b1, w2, b2, w3, b3 = params
    xf = x_nchw.reshape(x_nchw.shape[0], -1)
    h1 = jnp.maximum(
        jnp.dot(xf.astype(jnp.bfloat16), w1.astype(jnp.bfloat16),
                preferred_element_type=jnp.float32) + b1, 0.0)
    h2 = jnp.maximum(
        jnp.dot(h1.astype(jnp.bfloat16), w2.astype(jnp.bfloat16),
                preferred_element_type=jnp.float32) + b2, 0.0)
    return jnp.dot(h2.astype(jnp.bfloat16), w3.astype(jnp.bfloat16),
                   preferred_element_type=jnp.float32) + b3


def _reference_f32(x_nchw, params):
    w1, b1, w2, b2, w3, b3 = params
    xf = x_nchw.reshape(x_nchw.shape[0], -1)
    h1 = jnp.maximum(xf @ w1 + b1, 0.0)
    h2 = jnp.maximum(h1 @ w2 + b2, 0.0)
    return h2 @ w3 + b3


if __name__ == "__main__":
    key = jax.random.PRNGKey(0)
    kx, kp, kx2 = jax.random.split(key, 3)

    params = init_params(kp)
    prepped = prepare_params(params)   # one-time weight cast/pad, reused below

    # Small inference-style batch (pads only to 16 rows, 2 grid steps of 8).
    B = 8
    x = jax.random.normal(kx, (B, 1, 28, 28), dtype=jnp.float32)
    logits = jax.block_until_ready(neural_network_forward(x, prepped))
    assert logits.shape == (B, OUT)
    assert jnp.allclose(logits, _reference_bf16(x, params), atol=1e-2, rtol=1e-2)
    assert jnp.allclose(logits, _reference_f32(x, params), atol=5e-2, rtol=5e-2)

    # Non-multiple-of-16 batch exercising the multi-tile path (pads 40 -> 48, 2 tiles).
    B2 = 40
    x2 = jax.random.normal(kx2, (B2, 1, 28, 28), dtype=jnp.float32)
    logits2 = jax.block_until_ready(neural_network_forward(x2, prepped))
    assert logits2.shape == (B2, OUT)
    assert jnp.allclose(logits2, _reference_bf16(x2, params), atol=1e-2, rtol=1e-2)
    assert jnp.allclose(logits2, _reference_f32(x2, params), atol=5e-2, rtol=5e-2)

    print("KERNEL_OK")
</pallas_src>

<mosaic_0001>
module attributes {stable_mosaic.version = 11 : i64} {
  func.func @mlp_kernel(%arg0: i32, %arg1: memref<8x784xf32, #tpu.memory_space<vmem>>, %arg2: memref<784x512xbf16, #tpu.memory_space<vmem>>, %arg3: memref<1x512xf32, #tpu.memory_space<vmem>>, %arg4: memref<512x512xbf16, #tpu.memory_space<vmem>>, %arg5: memref<1x512xf32, #tpu.memory_space<vmem>>, %arg6: memref<512x128xbf16, #tpu.memory_space<vmem>>, %arg7: memref<1x128xf32, #tpu.memory_space<vmem>>, %arg8: memref<8x128xf32, #tpu.memory_space<vmem>>) attributes {dimension_semantics = [#tpu.dimension_semantics<parallel>], iteration_bounds = array<i64: 2>, scalar_prefetch = 0 : i64, scratch_operands = 0 : i64, tpu.core_type = #tpu.core_type<tc>, window_params = [{transform_indices = @transform_0, window_bounds = array<i64: 8, 784>}, {pipeline_mode = #tpu.pipeline_mode<synchronous>, transform_indices = @transform_1, window_bounds = array<i64: 784, 512>}, {pipeline_mode = #tpu.pipeline_mode<synchronous>, transform_indices = @transform_2, window_bounds = array<i64: 1, 512>}, {pipeline_mode = #tpu.pipeline_mode<synchronous>, transform_indices = @transform_3, window_bounds = array<i64: 512, 512>}, {pipeline_mode = #tpu.pipeline_mode<synchronous>, transform_indices = @transform_4, window_bounds = array<i64: 1, 512>}, {pipeline_mode = #tpu.pipeline_mode<synchronous>, transform_indices = @transform_5, window_bounds = array<i64: 512, 128>}, {pipeline_mode = #tpu.pipeline_mode<synchronous>, transform_indices = @transform_6, window_bounds = array<i64: 1, 128>}, {transform_indices = @transform_7, window_bounds = array<i64: 8, 128>}]} {
    %c0 = arith.constant 0 : index
    %c0_0 = arith.constant 0 : index
    %0 = vector.load %arg1[%c0, %c0_0] : memref<8x784xf32, #tpu.memory_space<vmem>>, vector<8x784xf32>
    %1 = arith.truncf %0 : vector<8x784xf32> to vector<8x784xbf16>
    %c0_1 = arith.constant 0 : index
    %c0_2 = arith.constant 0 : index
    %2 = vector.load %arg2[%c0_1, %c0_2] : memref<784x512xbf16, #tpu.memory_space<vmem>>, vector<784x512xbf16>
    %cst = arith.constant dense<0.000000e+00> : vector<8x512xf32>
    %3 = tpu.matmul %1, %2, %cst {dimension_numbers = #tpu.dot_dimension_numbers<[1], [0], [0], [1], [0, 0, 1, 1], [], []>} : vector<8x784xbf16>, vector<784x512xbf16>, vector<8x512xf32> -> vector<8x512xf32>
    %c0_3 = arith.constant 0 : index
    %c0_4 = arith.constant 0 : index
    %4 = vector.load %arg3[%c0_3, %c0_4] : memref<1x512xf32, #tpu.memory_space<vmem>>, vector<1x512xf32>
    %5 = vector.broadcast %4 : vector<1x512xf32> to vector<8x512xf32>
    %6 = arith.addf %3, %5 : vector<8x512xf32>
    %cst_5 = arith.constant 0.000000e+00 : f32
    %7 = vector.broadcast %cst_5 : f32 to vector<8x512xf32>
    %8 = arith.maximumf %6, %7 : vector<8x512xf32>
    %9 = arith.truncf %8 : vector<8x512xf32> to vector<8x512xbf16>
    %c0_6 = arith.constant 0 : index
    %c0_7 = arith.constant 0 : index
    %10 = vector.load %arg4[%c0_6, %c0_7] : memref<512x512xbf16, #tpu.memory_space<vmem>>, vector<512x512xbf16>
    %cst_8 = arith.constant dense<0.000000e+00> : vector<8x512xf32>
    %11 = tpu.matmul %9, %10, %cst_8 {dimension_numbers = #tpu.dot_dimension_numbers<[1], [0], [0], [1], [0, 0, 1, 1], [], []>} : vector<8x512xbf16>, vector<512x512xbf16>, vector<8x512xf32> -> vector<8x512xf32>
    %c0_9 = arith.constant 0 : index
    %c0_10 = arith.constant 0 : index
    %12 = vector.load %arg5[%c0_9, %c0_10] : memref<1x512xf32, #tpu.memory_space<vmem>>, vector<1x512xf32>
    %13 = vector.broadcast %12 : vector<1x512xf32> to vector<8x512xf32>
    %14 = arith.addf %11, %13 : vector<8x512xf32>
    %cst_11 = arith.constant 0.000000e+00 : f32
    %15 = vector.broadcast %cst_11 : f32 to vector<8x512xf32>
    %16 = arith.maximumf %14, %15 : vector<8x512xf32>
    %17 = arith.truncf %16 : vector<8x512xf32> to vector<8x512xbf16>
    %c0_12 = arith.constant 0 : index
    %c0_13 = arith.constant 0 : index
    %18 = vector.load %arg6[%c0_12, %c0_13] : memref<512x128xbf16, #tpu.memory_space<vmem>>, vector<512x128xbf16>
    %cst_14 = arith.constant dense<0.000000e+00> : vector<8x128xf32>
    %19 = tpu.matmul %17, %18, %cst_14 {dimension_numbers = #tpu.dot_dimension_numbers<[1], [0], [0], [1], [0, 0, 1, 1], [], []>} : vector<8x512xbf16>, vector<512x128xbf16>, vector<8x128xf32> -> vector<8x128xf32>
    %c0_15 = arith.constant 0 : index
    %c0_16 = arith.constant 0 : index
    %20 = vector.load %arg7[%c0_15, %c0_16] : memref<1x128xf32, #tpu.memory_space<vmem>>, vector<1x128xf32>
    %21 = vector.broadcast %20 : vector<1x128xf32> to vector<8x128xf32>
    %22 = arith.addf %19, %21 : vector<8x128xf32>
    %c0_17 = arith.constant 0 : index
    %c0_18 = arith.constant 0 : index
    %23 = vector.load %arg8[%c0_17, %c0_18] : memref<8x128xf32, #tpu.memory_space<vmem>>, vector<8x128xf32>
    tpu.vector_store %arg8[%c0_17, %c0_18], %22 {strides = array<i32>} : memref<8x128xf32, #tpu.memory_space<vmem>>, vector<8x128xf32>,
    return
  }
  func.func @transform_0(%arg0: i32) -> (i32, i32) {
    %c0_i32 = arith.constant 0 : i32
    %c0_i32_0 = arith.constant 0 : i32
    return %arg0, %c0_i32 : i32, i32
  }
  func.func @transform_1(%arg0: i32) -> (i32, i32) {
    %c0_i32 = arith.constant 0 : i32
    %c0_i32_0 = arith.constant 0 : i32
    %c0_i32_1 = arith.constant 0 : i32
    return %c0_i32, %c0_i32_0 : i32, i32
  }
  func.func @transform_2(%arg0: i32) -> (i32, i32) {
    %c0_i32 = arith.constant 0 : i32
    %c0_i32_0 = arith.constant 0 : i32
    %c0_i32_1 = arith.constant 0 : i32
    return %c0_i32, %c0_i32_0 : i32, i32
  }
  func.func @transform_3(%arg0: i32) -> (i32, i32) {
    %c0_i32 = arith.constant 0 : i32
    %c0_i32_0 = arith.constant 0 : i32
    %c0_i32_1 = arith.constant 0 : i32
    return %c0_i32, %c0_i32_0 : i32, i32
  }
  func.func @transform_4(%arg0: i32) -> (i32, i32) {
    %c0_i32 = arith.constant 0 : i32
    %c0_i32_0 = arith.constant 0 : i32
    %c0_i32_1 = arith.constant 0 : i32
    return %c0_i32, %c0_i32_0 : i32, i32
  }
  func.func @transform_5(%arg0: i32) -> (i32, i32) {
    %c0_i32 = arith.constant 0 : i32
    %c0_i32_0 = arith.constant 0 : i32
    %c0_i32_1 = arith.constant 0 : i32
    return %c0_i32, %c0_i32_0 : i32, i32
  }
  func.func @transform_6(%arg0: i32) -> (i32, i32) {
    %c0_i32 = arith.constant 0 : i32
    %c0_i32_0 = arith.constant 0 : i32
    %c0_i32_1 = arith.constant 0 : i32
    return %c0_i32, %c0_i32_0 : i32, i32
  }
  func.func @transform_7(%arg0: i32) -> (i32, i32) {
    %c0_i32 = arith.constant 0 : i32
    %c0_i32_0 = arith.constant 0 : i32
    return %arg0, %c0_i32 : i32, i32
  }
}

</mosaic_0001>

<llo_original>
// kernel: tpu_custom_call.1
$region0: #{tpu_custom_call.1}
  #allocation0 [shape = 'u32[]', space=smem, size = 0x4, offset = 0x4, fixed_abs, tag = 'smem constant byte address 0x4 - core index']
  #allocation1 [shape = 'u32[144,128]{1,0:T(1,128)}', space=vmem, size = 0x12000, scoped, tag = 'internal scratch']
  %s0 = inlined_call_operand.hbm [shape: f32[16,784], index: 0, kind: input, shape index: {}]
  %s1 = inlined_call_operand.hbm [shape: bf16[784,512], index: 1, kind: input, shape index: {}]
  %s2 = inlined_call_operand.vmem [shape: f32[1,512], index: 2, kind: input, shape index: {}]
  %s3 = inlined_call_operand.hbm [shape: bf16[512,512], index: 3, kind: input, shape index: {}]
  %s4 = inlined_call_operand.vmem [shape: f32[1,512], index: 4, kind: input, shape index: {}]
  %s5 = inlined_call_operand.hbm [shape: bf16[512,128], index: 5, kind: input, shape index: {}]
  %s6 = inlined_call_operand.vmem [shape: f32[1,128], index: 6, kind: input, shape index: {}]
  %s7 = inlined_call_operand.hbm [shape: f32[16,128], index: 7, kind: output, shape index: {}]
  %s8 = sld [smem:[#allocation0]]
  $region77: #{tpu_custom_call.1} parent=0
    _
  %s10 = ssub.s32 1, %s8
  %s11 = scalar_select 0, %s10, %s8
  $region1: #{tpu_custom_call.1} parent=0
    #allocation2 [shape = 'u8[57344]{0}', space=vmem, size = 0xe000, scoped, tag = 'input window, operand 0']
    #allocation3 [shape = 's32[2]{0}', space=sflag, size = 0x8, scoped, tag = 'scoped memory for tpu_custom_call.1']
    #allocation4 [shape = 's32[2]{0}', space=sflag, size = 0x8, scoped, tag = 'scoped memory for tpu_custom_call.1']
    #allocation5 [shape = 'u8[802816]{0}', space=vmem, size = 0xc4000, scoped, tag = 'input window, operand 1, single buffered']
    #allocation6 [shape = 's32[1]{0}', space=sflag, size = 0x4, scoped, tag = 'scoped memory for tpu_custom_call.1']
    #allocation7 [shape = 'u8[524288]{0}', space=vmem, size = 0x80000, scoped, tag = 'input window, operand 3, single buffered']
    #allocation8 [shape = 'u8[131072]{0}', space=vmem, size = 0x20000, scoped, tag = 'input window, operand 5, single buffered']
    #allocation9 [shape = 's32[1]{0}', space=sflag, size = 0x4, scoped, tag = 'scoped memory for tpu_custom_call.1']
    #allocation10 [shape = 'u8[8192]{0}', space=vmem, size = 0x2000, scoped, tag = 'output window, operand 0']
    %12 = vsyncpa [#allocation3], 0
    %s13 = scalar_lea.sflag [#allocation3], 1
    %14 = vsyncpa %s13, 0
    %15 = vsyncpa [#allocation6], 0
    %16 = vsyncpa [#allocation9], 0
    %17 = vsyncpa [#allocation4], 0
    %s18 = scalar_lea.sflag [#allocation4], 1
    %19 = vsyncpa %s18, 0
    loop: start=0, step=1, limit=4
    $region2: #{tpu_custom_call.1} parent=1 // loop_pre_header
      _
    $region3: #{tpu_custom_call.1} parent=1 // loop_header
      %s21 = sphi 0, %s25
      %p22 = scmp.ge.s32.totalorder %s21, 4
      %s31 = sphi 0, %s33
      %s34 = sphi 0, %s31
      %s35 = sphi 0, %s34
      %s51 = sphi 0, %s35
      %s55 = sphi 0, %s55
      %s57 = sphi 0, %s55
      %s58 = sphi 0, %s57
      %s72 = sphi 0, %s58
      %s76 = sphi 0, %s76
      %s78 = sphi 0, %s76
      %s79 = sphi 0, %s78
      %s93 = sphi 0, %s79
      %s97 = sphi 0, %s97
      %s99 = sphi 0, %s97
      %s100 = sphi 0, %s99
      %s114 = sphi 0, %s100
      %s118 = sphi 0, %s118
      %s120 = sphi 0, %s118
      %s121 = sphi 0, %s120
      %s135 = sphi 0, %s121
      %s139 = sphi 0, %s139
      %s141 = sphi 0, %s139
      %s142 = sphi 0, %s141
      %s156 = sphi 0, %s142
      %s160 = sphi 0, %s160
      %s162 = sphi 0, %s160
      %s163 = sphi 0, %s162
      %s177 = sphi 0, %s163
      %s183 = sphi 0, %s185
      %s186 = sphi 0, %s183
      %s187 = sphi 0, %s186
      %s203 = sphi 0, %s187
    $region4: #{tpu_custom_call.1} parent=1 // loop_header_branch
      %24 = sbr.rel (%p22) target = $region8
    $region5: #{tpu_custom_call.1} parent=1 // loop_body
      %s26 = ssub.s32 %s21, 1
      %s27 = ssub.s32 %s21, 2
      %s28 = sadd.s32 %s21, 1
      %s29 = ssub.s32 %s21, %s28
      %p30 = scmp.eq.s32.totalorder %s29, 0
      %s32 = sadd.s32 %s31, 1
      %s33 = scalar_select %p30, %s31, %s32
      %p36 = pneg %p30
      %p37 = scmp.eq.s32.totalorder %s21, 1
      %p38 = por %p36, %p37
      %p39 = scmp.ne.s32.totalorder %s31, %s34
      %p40 = scmp.eq.s32.totalorder %s21, 0
      %p41 = por %p39, %p40
      %p42 = scmp.ne.s32.totalorder %s31, %s34
      %p43 = scmp.eq.s32.totalorder %s26, 1
      %p44 = por %p42, %p43
      %p45 = scmp.ne.s32.totalorder %s34, %s35
      %p46 = scmp.eq.s32.totalorder %s26, 0
      %p47 = por %p45, %p46
      %p48 = scmp.ne.s32.totalorder %s34, %s35
      %p49 = scmp.eq.s32.totalorder %s27, 1
      %p50 = por %p48, %p49
      %p52 = scmp.ne.s32.totalorder %s35, %s51
      %p53 = scmp.eq.s32.totalorder %s27, 0
      %p54 = por %p52, %p53
      %s56 = sadd.s32 %s55, 1
      %p59 = scmp.eq.s32.totalorder %s21, 1
      %p60 = scmp.ne.s32.totalorder %s55, %s57
      %p61 = scmp.eq.s32.totalorder %s21, 0
      %p62 = por %p60, %p61
      %p63 = scmp.ne.s32.totalorder %s55, %s57
      %p64 = scmp.eq.s32.totalorder %s26, 1
      %p65 = por %p63, %p64
      %p66 = scmp.ne.s32.totalorder %s57, %s58
      %p67 = scmp.eq.s32.totalorder %s26, 0
      %p68 = por %p66, %p67
      %p69 = scmp.ne.s32.totalorder %s57, %s58
      %p70 = scmp.eq.s32.totalorder %s27, 1
      %p71 = por %p69, %p70
      %p73 = scmp.ne.s32.totalorder %s58, %s72
      %p74 = scmp.eq.s32.totalorder %s27, 0
      %p75 = por %p73, %p74
      %s77 = sadd.s32 %s76, 1
      %p80 = scmp.eq.s32.totalorder %s21, 1
      %p81 = scmp.ne.s32.totalorder %s76, %s78
      %p82 = scmp.eq.s32.totalorder %s21, 0
      %p83 = por %p81, %p82
      %p84 = scmp.ne.s32.totalorder %s76, %s78
      %p85 = scmp.eq.s32.totalorder %s26, 1
      %p86 = por %p84, %p85
      %p87 = scmp.ne.s32.totalorder %s78, %s79
      %p88 = scmp.eq.s32.totalorder %s26, 0
      %p89 = por %p87, %p88
      %p90 = scmp.ne.s32.totalorder %s78, %s79
      %p91 = scmp.eq.s32.totalorder %s27, 1
      %p92 = por %p90, %p91
      %p94 = scmp.ne.s32.totalorder %s79, %s93
      %p95 = scmp.eq.s32.totalorder %s27, 0
      %p96 = por %p94, %p95
      %s98 = sadd.s32 %s97, 1
      %p101 = scmp.eq.s32.totalorder %s21, 1
      %p102 = scmp.ne.s32.totalorder %s97, %s99
      %p103 = scmp.eq.s32.totalorder %s21, 0
      %p104 = por %p102, %p103
      %p105 = scmp.ne.s32.totalorder %s97, %s99
      %p106 = scmp.eq.s32.totalorder %s26, 1
      %p107 = por %p105, %p106
      %p108 = scmp.ne.s32.totalorder %s99, %s100
      %p109 = scmp.eq.s32.totalorder %s26, 0
      %p110 = por %p108, %p109
      %p111 = scmp.ne.s32.totalorder %s99, %s100
      %p112 = scmp.eq.s32.totalorder %s27, 1
      %p113 = por %p111, %p112
      %p115 = scmp.ne.s32.totalorder %s100, %s114
      %p116 = scmp.eq.s32.totalorder %s27, 0
      %p117 = por %p115, %p116
      %s119 = sadd.s32 %s118, 1
      %p122 = scmp.eq.s32.totalorder %s21, 1
      %p123 = scmp.ne.s32.totalorder %s118, %s120
      %p124 = scmp.eq.s32.totalorder %s21, 0
      %p125 = por %p123, %p124
      %p126 = scmp.ne.s32.totalorder %s118, %s120
      %p127 = scmp.eq.s32.totalorder %s26, 1
      %p128 = por %p126, %p127
      %p129 = scmp.ne.s32.totalorder %s120, %s121
      %p130 = scmp.eq.s32.totalorder %s26, 0
      %p131 = por %p129, %p130
      %p132 = scmp.ne.s32.totalorder %s120, %s121
      %p133 = scmp.eq.s32.totalorder %s27, 1
      %p134 = por %p132, %p133
      %p136 = scmp.ne.s32.totalorder %s121, %s135
      %p137 = scmp.eq.s32.totalorder %s27, 0
      %p138 = por %p136, %p137
      %s140 = sadd.s32 %s139, 1
      %p143 = scmp.eq.s32.totalorder %s21, 1
      %p144 = scmp.ne.s32.totalorder %s139, %s141
      %p145 = scmp.eq.s32.totalorder %s21, 0
      %p146 = por %p144, %p145
      %p147 = scmp.ne.s32.totalorder %s139, %s141
      %p148 = scmp.eq.s32.totalorder %s26, 1
      %p149 = por %p147, %p148
      %p150 = scmp.ne.s32.totalorder %s141, %s142
      %p151 = scmp.eq.s32.totalorder %s26, 0
      %p152 = por %p150, %p151
      %p153 = scmp.ne.s32.totalorder %s141, %s142
      %p154 = scmp.eq.s32.totalorder %s27, 1
      %p155 = por %p153, %p154
      %p157 = scmp.ne.s32.totalorder %s142, %s156
      %p158 = scmp.eq.s32.totalorder %s27, 0
      %p159 = por %p157, %p158
      %s161 = sadd.s32 %s160, 1
      %p164 = scmp.eq.s32.totalorder %s21, 1
      %p165 = scmp.ne.s32.totalorder %s160, %s162
      %p166 = scmp.eq.s32.totalorder %s21, 0
      %p167 = por %p165, %p166
      %p168 = scmp.ne.s32.totalorder %s160, %s162
      %p169 = scmp.eq.s32.totalorder %s26, 1
      %p170 = por %p168, %p169
      %p171 = scmp.ne.s32.totalorder %s162, %s163
      %p172 = scmp.eq.s32.totalorder %s26, 0
      %p173 = por %p171, %p172
      %p174 = scmp.ne.s32.totalorder %s162, %s163
      %p175 = scmp.eq.s32.totalorder %s27, 1
      %p176 = por %p174, %p175
      %p178 = scmp.ne.s32.totalorder %s163, %s177
      %p179 = scmp.eq.s32.totalorder %s27, 0
      %p180 = por %p178, %p179
      %s181 = ssub.s32 %s21, %s28
      %p182 = scmp.eq.s32.totalorder %s181, 0
      %s184 = sadd.s32 %s183, 1
      %s185 = scalar_select %p182, %s183, %s184
      %p188 = pneg %p182
      %p189 = scmp.eq.s32.totalorder %s21, 1
      %p190 = por %p188, %p189
      %p191 = scmp.ne.s32.totalorder %s183, %s186
      %p192 = scmp.eq.s32.totalorder %s21, 0
      %p193 = por %p191, %p192
      %p194 = scmp.ne.s32.totalorder %s183, %s186
      %p195 = scmp.eq.s32.totalorder %s26, 1
      %p196 = por %p194, %p195
      %p197 = scmp.ne.s32.totalorder %s186, %s187
      %p198 = scmp.eq.s32.totalorder %s26, 0
      %p199 = por %p197, %p198
      %p200 = scmp.ne.s32.totalorder %s186, %s187
      %p201 = scmp.eq.s32.totalorder %s27, 1
      %p202 = por %p200, %p201
      %p204 = scmp.ne.s32.totalorder %s187, %s203
      %p205 = scmp.eq.s32.totalorder %s27, 0
      %p206 = por %p204, %p205
      %p207 = scmp.le.s32.totalorder 1, %s21
      %p208 = scmp.lt.s32.totalorder %s21, 3
      %p209 = pnand %p207, %p208
      %p210 = pneg %p209
      // Predicated region
      $region9: #{tpu_custom_call.1} parent=5 // pred_check
        _
      $region10: #{tpu_custom_call.1} parent=5 // pred_check_branch
        %212 = sbr.rel (%p209) target = $region12
      $region11: #{tpu_custom_call.1} parent=5 // pred_region
        %s213 = ssub.s32 %s21, 1
        // Predicated region
        $region13: #{tpu_custom_call.1} parent=11 // pred_check
          %p214 = pneg %p68
        $region14: #{tpu_custom_call.1} parent=11 // pred_check_branch
          %216 = sbr.rel (%p214) target = $region16
        $region15: #{tpu_custom_call.1} parent=11 // pred_region
          %s218 = ssub.s32 25088, 25088
          %219 = vsyncadd [#allocation6], %s218
          %s220 = sshll.u32 [#allocation5], 4
          %s221 = int_to_ptr.vmem [resolvable:$true] %s220
          %226 = dma.hbm_to_vmem [thread:$0]  %s1, 25088, %s221, [#allocation6], 256, 256, 16
        $region16: #{tpu_custom_call.1} parent=11 // pred_fallthru
          _
        // Predicated region
        $region17: #{tpu_custom_call.1} parent=11 // pred_check
          %p227 = pneg %p89
        $region18: #{tpu_custom_call.1} parent=11 // pred_check_branch
          %229 = sbr.rel (%p227) target = $region20
        $region19: #{tpu_custom_call.1} parent=11 // pred_region
          _
        $region20: #{tpu_custom_call.1} parent=11 // pred_fallthru
          _
        // Predicated region
        $region21: #{tpu_custom_call.1} parent=11 // pred_check
          %p230 = pneg %p110
        $region22: #{tpu_custom_call.1} parent=11 // pred_check_branch
          %232 = sbr.rel (%p230) target = $region24
        $region23: #{tpu_custom_call.1} parent=11 // pred_region
          %s234 = ssub.s32 16384, 16384
          %235 = vsyncadd [#allocation6], %s234
          %s236 = sshll.u32 [#allocation7], 4
          %s237 = int_to_ptr.vmem [resolvable:$true] %s236
          %242 = dma.hbm_to_vmem [thread:$0]  %s3, 16384, %s237, [#allocation6], 256, 256, 16
        $region24: #{tpu_custom_call.1} parent=11 // pred_fallthru
          _
        // Predicated region
        $region25: #{tpu_custom_call.1} parent=11 // pred_check
          %p243 = pneg %p131
        $region26: #{tpu_custom_call.1} parent=11 // pred_check_branch
          %245 = sbr.rel (%p243) target = $region28
        $region27: #{tpu_custom_call.1} parent=11 // pred_region
          _
        $region28: #{tpu_custom_call.1} parent=11 // pred_fallthru
          _
        // Predicated region
        $region29: #{tpu_custom_call.1} parent=11 // pred_check
          %p246 = pneg %p152
        $region30: #{tpu_custom_call.1} parent=11 // pred_check_branch
          %248 = sbr.rel (%p246) target = $region32
        $region31: #{tpu_custom_call.1} parent=11 // pred_region
          %s250 = ssub.s32 4096, 4096
          %251 = vsyncadd [#allocation9], %s250
          %s252 = sshll.u32 [#allocation8], 4
          %s253 = int_to_ptr.vmem [resolvable:$true] %s252
          %258 = dma.hbm_to_vmem [thread:$0]  %s5, 4096, %s253, [#allocation9], 64, 64, 4
        $region32: #{tpu_custom_call.1} parent=11 // pred_fallthru
          _
        // Predicated region
        $region33: #{tpu_custom_call.1} parent=11 // pred_check
          %p259 = pneg %p173
        $region34: #{tpu_custom_call.1} parent=11 // pred_check_branch
          %261 = sbr.rel (%p259) target = $region36
        $region35: #{tpu_custom_call.1} parent=11 // pred_region
          _
        $region36: #{tpu_custom_call.1} parent=11 // pred_fallthru
          _
      $region12: #{tpu_custom_call.1} parent=5 // pred_fallthru
        _
      %p262 = scmp.lt.s32.totalorder %s21, 2
      // Predicated region
      $region37: #{tpu_custom_call.1} parent=5 // pred_check
        %p263 = pneg %p262
      $region38: #{tpu_custom_call.1} parent=5 // pred_check_branch
        %265 = sbr.rel (%p263) target = $region40
      $region39: #{tpu_custom_call.1} parent=5 // pred_region
        // Predicated region
        $region41: #{tpu_custom_call.1} parent=39 // pred_check
          %p266 = pneg %p41
        $region42: #{tpu_custom_call.1} parent=39 // pred_check_branch
          %268 = sbr.rel (%p266) target = $region44
        $region43: #{tpu_custom_call.1} parent=39 // pred_region
          %s269 = sand.u32 %s31, 1
          %s270 = scalar_lea.sflag [#allocation3], %s269
          %s271 = sand.u32 %s31, 1
          %s272 = smul.addr %s271, 56
          %s273 = scalar_lea.vmem [#allocation2], %s272
          %s275 = ssub.s32 896, 896
          %276 = vsyncadd %s270, %s275
          %s277 = smul.addr %s21, 7
          %s278 = smul.addr %s277, 128
          %s279 = scalar_lea.hbm %s0, %s278
          %s281 = sshll.u32 %s273, 4
          %s282 = int_to_ptr.vmem [resolvable:$true] %s281
          %284 = dma.hbm_to_vmem [thread:$0]  %s279, 896, %s282, %s270
        $region44: #{tpu_custom_call.1} parent=39 // pred_fallthru
          _
      $region40: #{tpu_custom_call.1} parent=5 // pred_fallthru
        _
      %p285 = scmp.le.s32.totalorder 1, %s21
      %p286 = scmp.lt.s32.totalorder %s21, 3
      %p287 = pnand %p285, %p286
      %p288 = pneg %p287
      // Predicated region
      $region45: #{tpu_custom_call.1} parent=5 // pred_check
        _
      $region46: #{tpu_custom_call.1} parent=5 // pred_check_branch
        %290 = sbr.rel (%p287) target = $region48
      $region47: #{tpu_custom_call.1} parent=5 // pred_region
        %s291 = ssub.s32 %s21, 1
        %s292 = sand.u32 %s34, 1
        %s293 = scalar_lea.sflag [#allocation3], %s292
        %s294 = sand.u32 %s34, 1
        %s295 = smul.addr %s294, 56
        %s296 = scalar_lea.vmem [#allocation2], %s295
        // Predicated region
        $region49: #{tpu_custom_call.1} parent=47 // pred_check
          %p297 = pneg %p47
        $region50: #{tpu_custom_call.1} parent=47 // pred_check_branch
          %299 = sbr.rel (%p297) target = $region52
        $region51: #{tpu_custom_call.1} parent=47 // pred_region
          %300 = dma.done %s293, 896
        $region52: #{tpu_custom_call.1} parent=47 // pred_fallthru
          _
        // Predicated region
        $region53: #{tpu_custom_call.1} parent=47 // pred_check
          %p301 = pneg %p68
        $region54: #{tpu_custom_call.1} parent=47 // pred_check_branch
          %303 = sbr.rel (%p301) target = $region56
        $region55: #{tpu_custom_call.1} parent=47 // pred_region
          %304 = dma.done [#allocation6], 25088
        $region56: #{tpu_custom_call.1} parent=47 // pred_fallthru
          _
        // Predicated region
        $region57: #{tpu_custom_call.1} parent=47 // pred_check
          %p305 = pneg %p110
        $region58: #{tpu_custom_call.1} parent=47 // pred_check_branch
          %307 = sbr.rel (%p305) target = $region60
        $region59: #{tpu_custom_call.1} parent=47 // pred_region
          %308 = dma.done [#allocation6], 16384
        $region60: #{tpu_custom_call.1} parent=47 // pred_fallthru
          _
        // Predicated region
        $region61: #{tpu_custom_call.1} parent=47 // pred_check
          %p309 = pneg %p152
        $region62: #{tpu_custom_call.1} parent=47 // pred_check_branch
          %311 = sbr.rel (%p309) target = $region64
        $region63: #{tpu_custom_call.1} parent=47 // pred_region
          %312 = dma.done [#allocation9], 4096
        $region64: #{tpu_custom_call.1} parent=47 // pred_fallthru
          _
        %s313 = sand.u32 %s34, 1
        %s314 = scalar_lea.sflag [#allocation3], %s313
        %s315 = sand.u32 %s34, 1
        %s316 = smul.addr %s315, 56
        %s317 = scalar_lea.vmem [#allocation2], %s316
        %p318 = pneg %p47
        %p319 = pneg %p44
        %p320 = pneg %p68
        %p321 = pneg %p65
        %p322 = pneg %p89
        %p323 = pneg %p86
        %p324 = pneg %p110
        %p325 = pneg %p107
        %p326 = pneg %p131
        %p327 = pneg %p128
        %p328 = pneg %p152
        %p329 = pneg %p149
        %p330 = pneg %p173
        %p331 = pneg %p170
        %p332 = pneg %p199
        %p333 = pneg %p196
        %s334 = sand.u32 %s186, 1
        %s335 = scalar_lea.sflag [#allocation4], %s334
        %s336 = sand.u32 %s186, 1
        %s337 = smul.addr %s336, 8
        %s338 = scalar_lea.vmem [#allocation10], %s337
        %v340 = vld [vmem:[%s296] sm:$0xff]
        %v341 = vld [vmem:[%s296 + $0x8] sm:$0xff]
        %v342 = vld [vmem:[%s296 + $0x10] sm:$0xff]
        %v343 = vld [vmem:[%s296 + $0x18] sm:$0xff]
        %v344 = vld [vmem:[%s296 + $0x20] sm:$0xff]
        %v345 = vld [vmem:[%s296 + $0x28] sm:$0xff]
        %v346 = vld [vmem:[%s296 + $0x30] sm:$0xff]
        %v347 = vpack.c.bf16 %v340, %v340
        %v348 = vpack.c.bf16 %v341, %v341
        %v349 = vpack.c.bf16 %v342, %v342
        %v350 = vpack.c.bf16 %v343, %v343
        %v351 = vpack.c.bf16 %v344, %v344
        %v352 = vpack.c.bf16 %v345, %v345
        %v353 = vpack.c.bf16 %v346, %v346
        %v354 = vld [vmem:[#allocation5] sm:$0xff]
        %v355 = vld [vmem:[#allocation5 + $0x8] sm:$0xff]
        %v356 = vld [vmem:[#allocation5 + $0x10] sm:$0xff]
        %v357 = vld [vmem:[#allocation5 + $0x18] sm:$0xff]
        %v358 = vld [vmem:[#allocation5 + $0x20] sm:$0xff]
        %v359 = vld [vmem:[#allocation5 + $0x28] sm:$0xff]
        %v360 = vld [vmem:[#allocation5 + $0x30] sm:$0xff]
        %v361 = vld [vmem:[#allocation5 + $0x38] sm:$0xff]
        %v362 = vld [vmem:[#allocation5 + $0x40] sm:$0xff]
        %v363 = vld [vmem:[#allocation5 + $0x48] sm:$0xff]
        %v364 = vld [vmem:[#allocation5 + $0x50] sm:$0xff]
        %v365 = vld [vmem:[#allocation5 + $0x58] sm:$0xff]
        %v366 = vld [vmem:[#allocation5 + $0x60] sm:$0xff]
        %v367 = vld [vmem:[#allocation5 + $0x68] sm:$0xff]
        %v368 = vld [vmem:[#allocation5 + $0x70] sm:$0xff]
        %v369 = vld [vmem:[#allocation5 + $0x78] sm:$0xff]
        %v370 = vld [vmem:[#allocation5 + $0x80] sm:$0xff]
        %v371 = vld [vmem:[#allocation5 + $0x88] sm:$0xff]
        %v372 = vld [vmem:[#allocation5 + $0x90] sm:$0xff]
        %v373 = vld [vmem:[#allocation5 + $0x98] sm:$0xff]
        %v374 = vld [vmem:[#allocation5 + $0xa0] sm:$0xff]
        %v375 = vld [vmem:[#allocation5 + $0xa8] sm:$0xff]
        %v376 = vld [vmem:[#allocation5 + $0xb0] sm:$0xff]
        %v377 = vld [vmem:[#allocation5 + $0xb8] sm:$0xff]
        %v378 = vld [vmem:[#allocation5 + $0xc0] sm:$0xff]
        %v379 = vld [vmem:[#allocation5 + $0xc8] sm:$0xff]
        %v380 = vld [vmem:[#allocation5 + $0xd0] sm:$0xff]
        %v381 = vld [vmem:[#allocation5 + $0xd8] sm:$0xff]
        %v382 = vld [vmem:[#allocation5 + $0xe0] sm:$0xff]
        %v383 = vld [vmem:[#allocation5 + $0xe8] sm:$0xff]
        %v384 = vld [vmem:[#allocation5 + $0xf0] sm:$0xff]
        %v385 = vld [vmem:[#allocation5 + $0xf8] sm:$0xff]
        %v386 = vld [vmem:[#allocation5 + $0x100] sm:$0xff]
        %v387 = vld [vmem:[#allocation5 + $0x108] sm:$0xff]
        %v388 = vld [vmem:[#allocation5 + $0x110] sm:$0xff]
        %v389 = vld [vmem:[#allocation5 + $0x118] sm:$0xff]
        %v390 = vld [vmem:[#allocation5 + $0x120] sm:$0xff]
        %v391 = vld [vmem:[#allocation5 + $0x128] sm:$0xff]
        %v392 = vld [vmem:[#allocation5 + $0x130] sm:$0xff]
        %v393 = vld [vmem:[#allocation5 + $0x138] sm:$0xff]
        %v394 = vld [vmem:[#allocation5 + $0x140] sm:$0xff]
        %v395 = vld [vmem:[#allocation5 + $0x148] sm:$0xff]
        %v396 = vld [vmem:[#allocation5 + $0x150] sm:$0xff]
        %v397 = vld [vmem:[#allocation5 + $0x158] sm:$0xff]
        %v398 = vld [vmem:[#allocation5 + $0x160] sm:$0xff]
        %v399 = vld [vmem:[#allocation5 + $0x168] sm:$0xff]
        %v400 = vld [vmem:[#allocation5 + $0x170] sm:$0xff]
        %v401 = vld [vmem:[#allocation5 + $0x178] sm:$0xff]
        %v402 = vld [vmem:[#allocation5 + $0x180] sm:$0xff]
        %v403 = vld [vmem:[#allocation5 + $0x188] sm:$0xff]
        %v404 = vld [vmem:[#allocation5 + $0x190] sm:$0xff]
        %v405 = vld [vmem:[#allocation5 + $0x198] sm:$0xff]
        %v406 = vld [vmem:[#allocation5 + $0x1a0] sm:$0xff]
        %v407 = vld [vmem:[#allocation5 + $0x1a8] sm:$0xff]
        %v408 = vld [vmem:[#allocation5 + $0x1b0] sm:$0xff]
        %v409 = vld [vmem:[#allocation5 + $0x1b8] sm:$0xff]
        %v410 = vld [vmem:[#allocation5 + $0x1c0] sm:$0xff]
        %v411 = vld [vmem:[#allocation5 + $0x1c8] sm:$0xff]
        %v412 = vld [vmem:[#allocation5 + $0x1d0] sm:$0xff]
        %v413 = vld [vmem:[#allocation5 + $0x1d8] sm:$0xff]
        %v414 = vld [vmem:[#allocation5 + $0x1e0] sm:$0xff]
        %v415 = vld [vmem:[#allocation5 + $0x1e8] sm:$0xff]
        %v416 = vld [vmem:[#allocation5 + $0x1f0] sm:$0xff]
        %v417 = vld [vmem:[#allocation5 + $0x1f8] sm:$0xff]
        %v418 = vld [vmem:[#allocation5 + $0x200] sm:$0xff]
        %v419 = vld [vmem:[#allocation5 + $0x208] sm:$0xff]
        %v420 = vld [vmem:[#allocation5 + $0x210] sm:$0xff]
        %v421 = vld [vmem:[#allocation5 + $0x218] sm:$0xff]
        %v422 = vld [vmem:[#allocation5 + $0x220] sm:$0xff]
        %v423 = vld [vmem:[#allocation5 + $0x228] sm:$0xff]
        %v424 = vld [vmem:[#allocation5 + $0x230] sm:$0xff]
        %v425 = vld [vmem:[#allocation5 + $0x238] sm:$0xff]
        %v426 = vld [vmem:[#allocation5 + $0x240] sm:$0xff]
        %v427 = vld [vmem:[#allocation5 + $0x248] sm:$0xff]
        %v428 = vld [vmem:[#allocation5 + $0x250] sm:$0xff]
        %v429 = vld [vmem:[#allocation5 + $0x258] sm:$0xff]
        %v430 = vld [vmem:[#allocation5 + $0x260] sm:$0xff]
        %v431 = vld [vmem:[#allocation5 + $0x268] sm:$0xff]
        %v432 = vld [vmem:[#allocation5 + $0x270] sm:$0xff]
        %v433 = vld [vmem:[#allocation5 + $0x278] sm:$0xff]
        %v434 = vld [vmem:[#allocation5 + $0x280] sm:$0xff]
        %v435 = vld [vmem:[#allocation5 + $0x288] sm:$0xff]
        %v436 = vld [vmem:[#allocation5 + $0x290] sm:$0xff]
        %v437 = vld [vmem:[#allocation5 + $0x298] sm:$0xff]
        %v438 = vld [vmem:[#allocation5 + $0x2a0] sm:$0xff]
        %v439 = vld [vmem:[#allocation5 + $0x2a8] sm:$0xff]
        %v440 = vld [vmem:[#allocation5 + $0x2b0] sm:$0xff]
        %v441 = vld [vmem:[#allocation5 + $0x2b8] sm:$0xff]
        %v442 = vld [vmem:[#allocation5 + $0x2c0] sm:$0xff]
        %v443 = vld [vmem:[#allocation5 + $0x2c8] sm:$0xff]
        %v444 = vld [vmem:[#allocation5 + $0x2d0] sm:$0xff]
        %v445 = vld [vmem:[#allocation5 + $0x2d8] sm:$0xff]
        %v446 = vld [vmem:[#allocation5 + $0x2e0] sm:$0xff]
        %v447 = vld [vmem:[#allocation5 + $0x2e8] sm:$0xff]
        %v448 = vld [vmem:[#allocation5 + $0x2f0] sm:$0xff]
        %v449 = vld [vmem:[#allocation5 + $0x2f8] sm:$0xff]
        %v450 = vld [vmem:[#allocation5 + $0x300] sm:$0xff]
        %v451 = vld [vmem:[#allocation5 + $0x308] sm:$0xff]
        %v452 = vld [vmem:[#allocation5 + $0x310] sm:$0xff]
        %v453 = vld [vmem:[#allocation5 + $0x318] sm:$0xff]
        %v454 = vld [vmem:[#allocation5 + $0x320] sm:$0xff]
        %v455 = vld [vmem:[#allocation5 + $0x328] sm:$0xff]
        %v456 = vld [vmem:[#allocation5 + $0x330] sm:$0xff]
        %v457 = vld [vmem:[#allocation5 + $0x338] sm:$0xff]
        %v458 = vld [vmem:[#allocation5 + $0x340] sm:$0xff]
        %v459 = vld [vmem:[#allocation5 + $0x348] sm:$0xff]
        %v460 = vld [vmem:[#allocation5 + $0x350] sm:$0xff]
        %v461 = vld [vmem:[#allocation5 + $0x358] sm:$0xff]
        %v462 = vld [vmem:[#allocation5 + $0x360] sm:$0xff]
        %v463 = vld [vmem:[#allocation5 + $0x368] sm:$0xff]
        %v464 = vld [vmem:[#allocation5 + $0x370] sm:$0xff]
        %v465 = vld [vmem:[#allocation5 + $0x378] sm:$0xff]
        %v466 = vld [vmem:[#allocation5 + $0x380] sm:$0xff]
        %v467 = vld [vmem:[#allocation5 + $0x388] sm:$0xff]
        %v468 = vld [vmem:[#allocation5 + $0x390] sm:$0xff]
        %v469 = vld [vmem:[#allocation5 + $0x398] sm:$0xff]
        %v470 = vld [vmem:[#allocation5 + $0x3a0] sm:$0xff]
        %v471 = vld [vmem:[#allocation5 + $0x3a8] sm:$0xff]
        %v472 = vld [vmem:[#allocation5 + $0x3b0] sm:$0xff]
        %v473 = vld [vmem:[#allocation5 + $0x3b8] sm:$0xff]
        %v474 = vld [vmem:[#allocation5 + $0x3c0] sm:$0xff]
        %v475 = vld [vmem:[#allocation5 + $0x3c8] sm:$0xff]
        %v476 = vld [vmem:[#allocation5 + $0x3d0] sm:$0xff]
        %v477 = vld [vmem:[#allocation5 + $0x3d8] sm:$0xff]
        %v478 = vld [vmem:[#allocation5 + $0x3e0] sm:$0xff]
        %v479 = vld [vmem:[#allocation5 + $0x3e8] sm:$0xff]
        %v480 = vld [vmem:[#allocation5 + $0x3f0] sm:$0xff]
        %v481 = vld [vmem:[#allocation5 + $0x3f8] sm:$0xff]
        %v482 = vld [vmem:[#allocation5 + $0x400] sm:$0xff]
        %v483 = vld [vmem:[#allocation5 + $0x408] sm:$0xff]
        %v484 = vld [vmem:[#allocation5 + $0x410] sm:$0xff]
        %v485 = vld [vmem:[#allocation5 + $0x418] sm:$0xff]
        %v486 = vld [vmem:[#allocation5 + $0x420] sm:$0xff]
        %v487 = vld [vmem:[#allocation5 + $0x428] sm:$0xff]
        %v488 = vld [vmem:[#allocation5 + $0x430] sm:$0xff]
        %v489 = vld [vmem:[#allocation5 + $0x438] sm:$0xff]
        %v490 = vld [vmem:[#allocation5 + $0x440] sm:$0xff]
        %v491 = vld [vmem:[#allocation5 + $0x448] sm:$0xff]
        %v492 = vld [vmem:[#allocation5 + $0x450] sm:$0xff]
        %v493 = vld [vmem:[#allocation5 + $0x458] sm:$0xff]
        %v494 = vld [vmem:[#allocation5 + $0x460] sm:$0xff]
        %v495 = vld [vmem:[#allocation5 + $0x468] sm:$0xff]
        %v496 = vld [vmem:[#allocation5 + $0x470] sm:$0xff]
        %v497 = vld [vmem:[#allocation5 + $0x478] sm:$0xff]
        %v498 = vld [vmem:[#allocation5 + $0x480] sm:$0xff]
        %v499 = vld [vmem:[#allocation5 + $0x488] sm:$0xff]
        %v500 = vld [vmem:[#allocation5 + $0x490] sm:$0xff]
        %v501 = vld [vmem:[#allocation5 + $0x498] sm:$0xff]
        %v502 = vld [vmem:[#allocation5 + $0x4a0] sm:$0xff]
        %v503 = vld [vmem:[#allocation5 + $0x4a8] sm:$0xff]
        %v504 = vld [vmem:[#allocation5 + $0x4b0] sm:$0xff]
        %v505 = vld [vmem:[#allocation5 + $0x4b8] sm:$0xff]
        %v506 = vld [vmem:[#allocation5 + $0x4c0] sm:$0xff]
        %v507 = vld [vmem:[#allocation5 + $0x4c8] sm:$0xff]
        %v508 = vld [vmem:[#allocation5 + $0x4d0] sm:$0xff]
        %v509 = vld [vmem:[#allocation5 + $0x4d8] sm:$0xff]
        %v510 = vld [vmem:[#allocation5 + $0x4e0] sm:$0xff]
        %v511 = vld [vmem:[#allocation5 + $0x4e8] sm:$0xff]
        %v512 = vld [vmem:[#allocation5 + $0x4f0] sm:$0xff]
        %v513 = vld [vmem:[#allocation5 + $0x4f8] sm:$0xff]
        %v514 = vld [vmem:[#allocation5 + $0x500] sm:$0xff]
        %v515 = vld [vmem:[#allocation5 + $0x508] sm:$0xff]
        %v516 = vld [vmem:[#allocation5 + $0x510] sm:$0xff]
        %v517 = vld [vmem:[#allocation5 + $0x518] sm:$0xff]
        %v518 = vld [vmem:[#allocation5 + $0x520] sm:$0xff]
        %v519 = vld [vmem:[#allocation5 + $0x528] sm:$0xff]
        %v520 = vld [vmem:[#allocation5 + $0x530] sm:$0xff]
        %v521 = vld [vmem:[#allocation5 + $0x538] sm:$0xff]
        %v522 = vld [vmem:[#allocation5 + $0x540] sm:$0xff]
        %v523 = vld [vmem:[#allocation5 + $0x548] sm:$0xff]
        %v524 = vld [vmem:[#allocation5 + $0x550] sm:$0xff]
        %v525 = vld [vmem:[#allocation5 + $0x558] sm:$0xff]
        %v526 = vld [vmem:[#allocation5 + $0x560] sm:$0xff]
        %v527 = vld [vmem:[#allocation5 + $0x568] sm:$0xff]
        %v528 = vld [vmem:[#allocation5 + $0x570] sm:$0xff]
        %v529 = vld [vmem:[#allocation5 + $0x578] sm:$0xff]
        %v530 = vld [vmem:[#allocation5 + $0x580] sm:$0xff]
        %v531 = vld [vmem:[#allocation5 + $0x588] sm:$0xff]
        %v532 = vld [vmem:[#allocation5 + $0x590] sm:$0xff]
        %v533 = vld [vmem:[#allocation5 + $0x598] sm:$0xff]
        %v534 = vld [vmem:[#allocation5 + $0x5a0] sm:$0xff]
        %v535 = vld [vmem:[#allocation5 + $0x5a8] sm:$0xff]
        %v536 = vld [vmem:[#allocation5 + $0x5b0] sm:$0xff]
        %v537 = vld [vmem:[#allocation5 + $0x5b8] sm:$0xff]
        %v538 = vld [vmem:[#allocation5 + $0x5c0] sm:$0xff]
        %v539 = vld [vmem:[#allocation5 + $0x5c8] sm:$0xff]
        %v540 = vld [vmem:[#allocation5 + $0x5d0] sm:$0xff]
        %v541 = vld [vmem:[#allocation5 + $0x5d8] sm:$0xff]
        %v542 = vld [vmem:[#allocation5 + $0x5e0] sm:$0xff]
        %v543 = vld [vmem:[#allocation5 + $0x5e8] sm:$0xff]
        %v544 = vld [vmem:[#allocation5 + $0x5f0] sm:$0xff]
        %v545 = vld [vmem:[#allocation5 + $0x5f8] sm:$0xff]
        %v546 = vld [vmem:[#allocation5 + $0x600] sm:$0xff]
        %v547 = vld [vmem:[#allocation5 + $0x608] sm:$0xff]
        %v548 = vld [vmem:[#allocation5 + $0x610] sm:$0xff]
        %v549 = vld [vmem:[#allocation5 + $0x618] sm:$0xff]
        %v550 = vld [vmem:[%s2] sm:$0xf]
        %v552 = vlaneseq
        %v553 = vshrl.u32 %v552, 7
        %v554 = vsub.s32 0, %v553
        %v555 = vrot.slane %v550, %v554
        %v556 = vlaneseq
        %v557 = vshrl.u32 %v556, 7
        %v558 = vsub.s32 1, %v557
        %v559 = vrot.slane %v550, %v558
        %v560 = vlaneseq
        %v561 = vshrl.u32 %v560, 7
        %v562 = vsub.s32 2, %v561
        %v563 = vrot.slane %v550, %v562
        %v564 = vlaneseq
        %v565 = vshrl.u32 %v564, 7
        %v566 = vsub.s32 3, %v565
        %v567 = vrot.slane %v550, %v566
        %v768 = vunpack.c.l.b16 %v354
        %v769 = vunpack.c.h.b16 %v354
        %v770 = vunpack.c.l.b16 %v355
        %v771 = vunpack.c.h.b16 %v355
        %v772 = vunpack.c.l.b16 %v356
        %v773 = vunpack.c.h.b16 %v356
        %v774 = vunpack.c.l.b16 %v357
        %v775 = vunpack.c.h.b16 %v357
        %v776 = vunpack.c.l.b16 %v358
        %v777 = vunpack.c.h.b16 %v358
        %v778 = vunpack.c.l.b16 %v359
        %v779 = vunpack.c.h.b16 %v359
        %v780 = vunpack.c.l.b16 %v360
        %v781 = vunpack.c.h.b16 %v360
        %v782 = vunpack.c.l.b16 %v361
        %v783 = vunpack.c.h.b16 %v361
        %v784 = vunpack.c.l.b16 %v362
        %v785 = vunpack.c.h.b16 %v362
        %v786 = vunpack.c.l.b16 %v363
        %v787 = vunpack.c.h.b16 %v363
        %v788 = vunpack.c.l.b16 %v364
        %v789 = vunpack.c.h.b16 %v364
        %v790 = vunpack.c.l.b16 %v365
        %v791 = vunpack.c.h.b16 %v365
        %v792 = vunpack.c.l.b16 %v366
        %v793 = vunpack.c.h.b16 %v366
        %v794 = vunpack.c.l.b16 %v367
        %v795 = vunpack.c.h.b16 %v367
        %v796 = vunpack.c.l.b16 %v368
        %v797 = vunpack.c.h.b16 %v368
        %v798 = vunpack.c.l.b16 %v369
        %v799 = vunpack.c.h.b16 %v369
        %v800 = vunpack.c.l.b16 %v370
        %v801 = vunpack.c.h.b16 %v370
        %v802 = vunpack.c.l.b16 %v371
        %v803 = vunpack.c.h.b16 %v371
        %v804 = vunpack.c.l.b16 %v372
        %v805 = vunpack.c.h.b16 %v372
        %v806 = vunpack.c.l.b16 %v373
        %v807 = vunpack.c.h.b16 %v373
        %v808 = vunpack.c.l.b16 %v374
        %v809 = vunpack.c.h.b16 %v374
        %v810 = vunpack.c.l.b16 %v375
        %v811 = vunpack.c.h.b16 %v375
        %v812 = vunpack.c.l.b16 %v376
        %v813 = vunpack.c.h.b16 %v376
        %v814 = vunpack.c.l.b16 %v377
        %v815 = vunpack.c.h.b16 %v377
        %v816 = vunpack.c.l.b16 %v378
        %v817 = vunpack.c.h.b16 %v378
        %v818 = vunpack.c.l.b16 %v379
        %v819 = vunpack.c.h.b16 %v379
        %v820 = vunpack.c.l.b16 %v380
        %v821 = vunpack.c.h.b16 %v380
        %v822 = vunpack.c.l.b16 %v381
        %v823 = vunpack.c.h.b16 %v381
        %v824 = vunpack.c.l.b16 %v382
        %v825 = vunpack.c.h.b16 %v382
        %v826 = vunpack.c.l.b16 %v383
        %v827 = vunpack.c.h.b16 %v383
        %v828 = vunpack.c.l.b16 %v384
        %v829 = vunpack.c.h.b16 %v384
        %v830 = vunpack.c.l.b16 %v385
        %v831 = vunpack.c.h.b16 %v385
        %v832 = vunpack.c.l.b16 %v386
        %v833 = vunpack.c.h.b16 %v386
        %v834 = vunpack.c.l.b16 %v387
        %v835 = vunpack.c.h.b16 %v387
        %v836 = vunpack.c.l.b16 %v388
        %v837 = vunpack.c.h.b16 %v388
        %v838 = vunpack.c.l.b16 %v389
        %v839 = vunpack.c.h.b16 %v389
        %v840 = vunpack.c.l.b16 %v390
        %v841 = vunpack.c.h.b16 %v390
        %v842 = vunpack.c.l.b16 %v391
        %v843 = vunpack.c.h.b16 %v391
        %v844 = vunpack.c.l.b16 %v392
        %v845 = vunpack.c.h.b16 %v392
        %v846 = vunpack.c.l.b16 %v393
        %v847 = vunpack.c.h.b16 %v393
        %v848 = vunpack.c.l.b16 %v394
        %v849 = vunpack.c.h.b16 %v394
        %v850 = vunpack.c.l.b16 %v395
        %v851 = vunpack.c.h.b16 %v395
        %v852 = vunpack.c.l.b16 %v396
        %v853 = vunpack.c.h.b16 %v396
        %v854 = vunpack.c.l.b16 %v397
        %v855 = vunpack.c.h.b16 %v397
        %v856 = vunpack.c.l.b16 %v398
        %v857 = vunpack.c.h.b16 %v398
        %v858 = vunpack.c.l.b16 %v399
        %v859 = vunpack.c.h.b16 %v399
        %v860 = vunpack.c.l.b16 %v400
        %v861 = vunpack.c.h.b16 %v400
        %v862 = vunpack.c.l.b16 %v401
        %v863 = vunpack.c.h.b16 %v401
        %v864 = vunpack.c.l.b16 %v402
        %v865 = vunpack.c.h.b16 %v402
        %v866 = vunpack.c.l.b16 %v403
        %v867 = vunpack.c.h.b16 %v403
        %v868 = vunpack.c.l.b16 %v404
        %v869 = vunpack.c.h.b16 %v404
        %v870 = vunpack.c.l.b16 %v405
        %v871 = vunpack.c.h.b16 %v405
        %v872 = vunpack.c.l.b16 %v406
        %v873 = vunpack.c.h.b16 %v406
        %v874 = vunpack.c.l.b16 %v407
        %v875 = vunpack.c.h.b16 %v407
        %v876 = vunpack.c.l.b16 %v408
        %v877 = vunpack.c.h.b16 %v408
        %v878 = vunpack.c.l.b16 %v409
        %v879 = vunpack.c.h.b16 %v409
        %v880 = vunpack.c.l.b16 %v410
        %v881 = vunpack.c.h.b16 %v410
        %v882 = vunpack.c.l.b16 %v411
        %v883 = vunpack.c.h.b16 %v411
        %v884 = vunpack.c.l.b16 %v412
        %v885 = vunpack.c.h.b16 %v412
        %v886 = vunpack.c.l.b16 %v413
        %v887 = vunpack.c.h.b16 %v413
        %v888 = vunpack.c.l.b16 %v414
        %v889 = vunpack.c.h.b16 %v414
        %v890 = vunpack.c.l.b16 %v415
        %v891 = vunpack.c.h.b16 %v415
        %v892 = vunpack.c.l.b16 %v416
        %v893 = vunpack.c.h.b16 %v416
        %v894 = vunpack.c.l.b16 %v417
        %v895 = vunpack.c.h.b16 %v417
        %v896 = vunpack.c.l.b16 %v418
        %v897 = vunpack.c.h.b16 %v418
        %v898 = vunpack.c.l.b16 %v419
        %v899 = vunpack.c.h.b16 %v419
        %v900 = vunpack.c.l.b16 %v420
        %v901 = vunpack.c.h.b16 %v420
        %v902 = vunpack.c.l.b16 %v421
        %v903 = vunpack.c.h.b16 %v421
        %v904 = vunpack.c.l.b16 %v422
        %v905 = vunpack.c.h.b16 %v422
        %v906 = vunpack.c.l.b16 %v423
        %v907 = vunpack.c.h.b16 %v423
        %v908 = vunpack.c.l.b16 %v424
        %v909 = vunpack.c.h.b16 %v424
        %v910 = vunpack.c.l.b16 %v425
        %v911 = vunpack.c.h.b16 %v425
        %v912 = vunpack.c.l.b16 %v426
        %v913 = vunpack.c.h.b16 %v426
        %v914 = vunpack.c.l.b16 %v427
        %v915 = vunpack.c.h.b16 %v427
        %v916 = vunpack.c.l.b16 %v428
        %v917 = vunpack.c.h.b16 %v428
        %v918 = vunpack.c.l.b16 %v429
        %v919 = vunpack.c.h.b16 %v429
        %v920 = vunpack.c.l.b16 %v430
        %v921 = vunpack.c.h.b16 %v430
        %v922 = vunpack.c.l.b16 %v431
        %v923 = vunpack.c.h.b16 %v431
        %v924 = vunpack.c.l.b16 %v432
        %v925 = vunpack.c.h.b16 %v432
        %v926 = vunpack.c.l.b16 %v433
        %v927 = vunpack.c.h.b16 %v433
        %v928 = vunpack.c.l.b16 %v434
        %v929 = vunpack.c.h.b16 %v434
        %v930 = vunpack.c.l.b16 %v435
        %v931 = vunpack.c.h.b16 %v435
        %v932 = vunpack.c.l.b16 %v436
        %v933 = vunpack.c.h.b16 %v436
        %v934 = vunpack.c.l.b16 %v437
        %v935 = vunpack.c.h.b16 %v437
        %v936 = vunpack.c.l.b16 %v438
        %v937 = vunpack.c.h.b16 %v438
        %v938 = vunpack.c.l.b16 %v439
        %v939 = vunpack.c.h.b16 %v439
        %v940 = vunpack.c.l.b16 %v440
        %v941 = vunpack.c.h.b16 %v440
        %v942 = vunpack.c.l.b16 %v441
        %v943 = vunpack.c.h.b16 %v441
        %v944 = vunpack.c.l.b16 %v442
        %v945 = vunpack.c.h.b16 %v442
        %v946 = vunpack.c.l.b16 %v443
        %v947 = vunpack.c.h.b16 %v443
        %v948 = vunpack.c.l.b16 %v444
        %v949 = vunpack.c.h.b16 %v444
        %v950 = vunpack.c.l.b16 %v445
        %v951 = vunpack.c.h.b16 %v445
        %v952 = vunpack.c.l.b16 %v446
        %v953 = vunpack.c.h.b16 %v446
        %v954 = vunpack.c.l.b16 %v447
        %v955 = vunpack.c.h.b16 %v447
        %v956 = vunpack.c.l.b16 %v448
        %v957 = vunpack.c.h.b16 %v448
        %v958 = vunpack.c.l.b16 %v449
        %v959 = vunpack.c.h.b16 %v449
        %v960 = vunpack.c.l.b16 %v450
        %v961 = vunpack.c.h.b16 %v450
        %v962 = vunpack.c.l.b16 %v451
        %v963 = vunpack.c.h.b16 %v451
        %v964 = vunpack.c.l.b16 %v452
        %v965 = vunpack.c.h.b16 %v452
        %v966 = vunpack.c.l.b16 %v453
        %v967 = vunpack.c.h.b16 %v453
        %v968 = vunpack.c.l.b16 %v454
        %v969 = vunpack.c.h.b16 %v454
        %v970 = vunpack.c.l.b16 %v455
        %v971 = vunpack.c.h.b16 %v455
        %v972 = vunpack.c.l.b16 %v456
        %v973 = vunpack.c.h.b16 %v456
        %v974 = vunpack.c.l.b16 %v457
        %v975 = vunpack.c.h.b16 %v457
        %v976 = vunpack.c.l.b16 %v458
        %v977 = vunpack.c.h.b16 %v458
        %v978 = vunpack.c.l.b16 %v459
        %v979 = vunpack.c.h.b16 %v459
        %v980 = vunpack.c.l.b16 %v460
        %v981 = vunpack.c.h.b16 %v460
        %v982 = vunpack.c.l.b16 %v461
        %v983 = vunpack.c.h.b16 %v461
        %v984 = vunpack.c.l.b16 %v462
        %v985 = vunpack.c.h.b16 %v462
        %v986 = vunpack.c.l.b16 %v463
        %v987 = vunpack.c.h.b16 %v463
        %v988 = vunpack.c.l.b16 %v464
        %v989 = vunpack.c.h.b16 %v464
        %v990 = vunpack.c.l.b16 %v465
        %v991 = vunpack.c.h.b16 %v465
        %v992 = vunpack.c.l.b16 %v466
        %v993 = vunpack.c.h.b16 %v466
        %v994 = vunpack.c.l.b16 %v467
        %v995 = vunpack.c.h.b16 %v467
        %v996 = vunpack.c.l.b16 %v468
        %v997 = vunpack.c.h.b16 %v468
        %v998 = vunpack.c.l.b16 %v469
        %v999 = vunpack.c.h.b16 %v469
        %v1000 = vunpack.c.l.b16 %v470
        %v1001 = vunpack.c.h.b16 %v470
        %v1002 = vunpack.c.l.b16 %v471
        %v1003 = vunpack.c.h.b16 %v471
        %v1004 = vunpack.c.l.b16 %v472
        %v1005 = vunpack.c.h.b16 %v472
        %v1006 = vunpack.c.l.b16 %v473
        %v1007 = vunpack.c.h.b16 %v473
        %v1008 = vunpack.c.l.b16 %v474
        %v1009 = vunpack.c.h.b16 %v474
        %v1010 = vunpack.c.l.b16 %v475
        %v1011 = vunpack.c.h.b16 %v475
        %v1012 = vunpack.c.l.b16 %v476
        %v1013 = vunpack.c.h.b16 %v476
        %v1014 = vunpack.c.l.b16 %v477
        %v1015 = vunpack.c.h.b16 %v477
        %v1016 = vunpack.c.l.b16 %v478
        %v1017 = vunpack.c.h.b16 %v478
        %v1018 = vunpack.c.l.b16 %v479
        %v1019 = vunpack.c.h.b16 %v479
        %v1020 = vunpack.c.l.b16 %v480
        %v1021 = vunpack.c.h.b16 %v480
        %v1022 = vunpack.c.l.b16 %v481
        %v1023 = vunpack.c.h.b16 %v481
        %v1024 = vunpack.c.l.b16 %v482
        %v1025 = vunpack.c.h.b16 %v482
        %v1026 = vunpack.c.l.b16 %v483
        %v1027 = vunpack.c.h.b16 %v483
        %v1028 = vunpack.c.l.b16 %v484
        %v1029 = vunpack.c.h.b16 %v484
        %v1030 = vunpack.c.l.b16 %v485
        %v1031 = vunpack.c.h.b16 %v485
        %v1032 = vunpack.c.l.b16 %v486
        %v1033 = vunpack.c.h.b16 %v486
        %v1034 = vunpack.c.l.b16 %v487
        %v1035 = vunpack.c.h.b16 %v487
        %v1036 = vunpack.c.l.b16 %v488
        %v1037 = vunpack.c.h.b16 %v488
        %v1038 = vunpack.c.l.b16 %v489
        %v1039 = vunpack.c.h.b16 %v489
        %v1040 = vunpack.c.l.b16 %v490
        %v1041 = vunpack.c.h.b16 %v490
        %v1042 = vunpack.c.l.b16 %v491
        %v1043 = vunpack.c.h.b16 %v491
        %v1044 = vunpack.c.l.b16 %v492
        %v1045 = vunpack.c.h.b16 %v492
        %v1046 = vunpack.c.l.b16 %v493
        %v1047 = vunpack.c.h.b16 %v493
        %v1048 = vunpack.c.l.b16 %v494
        %v1049 = vunpack.c.h.b16 %v494
        %v1050 = vunpack.c.l.b16 %v495
        %v1051 = vunpack.c.h.b16 %v495
        %v1052 = vunpack.c.l.b16 %v496
        %v1053 = vunpack.c.h.b16 %v496
        %v1054 = vunpack.c.l.b16 %v497
        %v1055 = vunpack.c.h.b16 %v497
        %v1056 = vunpack.c.l.b16 %v498
        %v1057 = vunpack.c.h.b16 %v498
        %v1058 = vunpack.c.l.b16 %v499
        %v1059 = vunpack.c.h.b16 %v499
        %v1060 = vunpack.c.l.b16 %v500
        %v1061 = vunpack.c.h.b16 %v500
        %v1062 = vunpack.c.l.b16 %v501
        %v1063 = vunpack.c.h.b16 %v501
        %v1064 = vunpack.c.l.b16 %v502
        %v1065 = vunpack.c.h.b16 %v502
        %v1066 = vunpack.c.l.b16 %v503
        %v1067 = vunpack.c.h.b16 %v503
        %v1068 = vunpack.c.l.b16 %v504
        %v1069 = vunpack.c.h.b16 %v504
        %v1070 = vunpack.c.l.b16 %v505
        %v1071 = vunpack.c.h.b16 %v505
        %v1072 = vunpack.c.l.b16 %v506
        %v1073 = vunpack.c.h.b16 %v506
        %v1074 = vunpack.c.l.b16 %v507
        %v1075 = vunpack.c.h.b16 %v507
        %v1076 = vunpack.c.l.b16 %v508
        %v1077 = vunpack.c.h.b16 %v508
        %v1078 = vunpack.c.l.b16 %v509
        %v1079 = vunpack.c.h.b16 %v509
        %v1080 = vunpack.c.l.b16 %v510
        %v1081 = vunpack.c.h.b16 %v510
        %v1082 = vunpack.c.l.b16 %v511
        %v1083 = vunpack.c.h.b16 %v511
        %v1084 = vunpack.c.l.b16 %v512
        %v1085 = vunpack.c.h.b16 %v512
        %v1086 = vunpack.c.l.b16 %v513
        %v1087 = vunpack.c.h.b16 %v513
        %v1088 = vunpack.c.l.b16 %v514
        %v1089 = vunpack.c.h.b16 %v514
        %v1090 = vunpack.c.l.b16 %v515
        %v1091 = vunpack.c.h.b16 %v515
        %v1092 = vunpack.c.l.b16 %v516
        %v1093 = vunpack.c.h.b16 %v516
        %v1094 = vunpack.c.l.b16 %v517
        %v1095 = vunpack.c.h.b16 %v517
        %v1096 = vunpack.c.l.b16 %v518
        %v1097 = vunpack.c.h.b16 %v518
        %v1098 = vunpack.c.l.b16 %v519
        %v1099 = vunpack.c.h.b16 %v519
        %v1100 = vunpack.c.l.b16 %v520
        %v1101 = vunpack.c.h.b16 %v520
        %v1102 = vunpack.c.l.b16 %v521
        %v1103 = vunpack.c.h.b16 %v521
        %v1104 = vunpack.c.l.b16 %v522
        %v1105 = vunpack.c.h.b16 %v522
        %v1106 = vunpack.c.l.b16 %v523
        %v1107 = vunpack.c.h.b16 %v523
        %v1108 = vunpack.c.l.b16 %v524
        %v1109 = vunpack.c.h.b16 %v524
        %v1110 = vunpack.c.l.b16 %v525
        %v1111 = vunpack.c.h.b16 %v525
        %v1112 = vunpack.c.l.b16 %v526
        %v1113 = vunpack.c.h.b16 %v526
        %v1114 = vunpack.c.l.b16 %v527
        %v1115 = vunpack.c.h.b16 %v527
        %v1116 = vunpack.c.l.b16 %v528
        %v1117 = vunpack.c.h.b16 %v528
        %v1118 = vunpack.c.l.b16 %v529
        %v1119 = vunpack.c.h.b16 %v529
        %v1120 = vunpack.c.l.b16 %v530
        %v1121 = vunpack.c.h.b16 %v530
        %v1122 = vunpack.c.l.b16 %v531
        %v1123 = vunpack.c.h.b16 %v531
        %v1124 = vunpack.c.l.b16 %v532
        %v1125 = vunpack.c.h.b16 %v532
        %v1126 = vunpack.c.l.b16 %v533
        %v1127 = vunpack.c.h.b16 %v533
        %v1128 = vunpack.c.l.b16 %v534
        %v1129 = vunpack.c.h.b16 %v534
        %v1130 = vunpack.c.l.b16 %v535
        %v1131 = vunpack.c.h.b16 %v535
        %v1132 = vunpack.c.l.b16 %v536
        %v1133 = vunpack.c.h.b16 %v536
        %v1134 = vunpack.c.l.b16 %v537
        %v1135 = vunpack.c.h.b16 %v537
        %v1136 = vunpack.c.l.b16 %v538
        %v1137 = vunpack.c.h.b16 %v538
        %v1138 = vunpack.c.l.b16 %v539
        %v1139 = vunpack.c.h.b16 %v539
        %v1140 = vunpack.c.l.b16 %v540
        %v1141 = vunpack.c.h.b16 %v540
        %v1142 = vunpack.c.l.b16 %v541
        %v1143 = vunpack.c.h.b16 %v541
        %v1144 = vunpack.c.l.b16 %v542
        %v1145 = vunpack.c.h.b16 %v542
        %v1146 = vunpack.c.l.b16 %v543
        %v1147 = vunpack.c.h.b16 %v543
        %v1148 = vunpack.c.l.b16 %v544
        %v1149 = vunpack.c.h.b16 %v544
        %v1150 = vunpack.c.l.b16 %v545
        %v1151 = vunpack.c.h.b16 %v545
        %v1152 = vunpack.c.l.b16 %v546
        %v1153 = vunpack.c.h.b16 %v546
        %v1154 = vunpack.c.l.b16 %v547
        %v1155 = vunpack.c.h.b16 %v547
        %v1156 = vunpack.c.l.b16 %v548
        %v1157 = vunpack.c.h.b16 %v548
        %v1158 = vunpack.c.l.b16 %v549
        %v1159 = vunpack.c.h.b16 %v549
        %v1160 = vpack.c.b16 %v772, %v768
        %v1161 = vpack.c.b16 %v773, %v769
        %v1162 = vpack.c.b16 %v774, %v770
        %v1163 = vpack.c.b16 %v775, %v771
        %v1164 = vpack.c.b16 %v780, %v776
        %v1165 = vpack.c.b16 %v781, %v777
        %v1166 = vpack.c.b16 %v782, %v778
        %v1167 = vpack.c.b16 %v783, %v779
        %v1168 = vpack.c.b16 %v788, %v784
        %v1169 = vpack.c.b16 %v789, %v785
        %v1170 = vpack.c.b16 %v790, %v786
        %v1171 = vpack.c.b16 %v791, %v787
        %v1172 = vpack.c.b16 %v796, %v792
        %v1173 = vpack.c.b16 %v797, %v793
        %v1174 = vpack.c.b16 %v798, %v794
        %v1175 = vpack.c.b16 %v799, %v795
        %v1176 = vpack.c.b16 %v804, %v800
        %v1177 = vpack.c.b16 %v805, %v801
        %v1178 = vpack.c.b16 %v806, %v802
        %v1179 = vpack.c.b16 %v807, %v803
        %v1180 = vpack.c.b16 %v812, %v808
        %v1181 = vpack.c.b16 %v813, %v809
        %v1182 = vpack.c.b16 %v814, %v810
        %v1183 = vpack.c.b16 %v815, %v811
        %v1184 = vpack.c.b16 %v820, %v816
        %v1185 = vpack.c.b16 %v821, %v817
        %v1186 = vpack.c.b16 %v822, %v818
        %v1187 = vpack.c.b16 %v823, %v819
        %v1188 = vpack.c.b16 %v828, %v824
        %v1189 = vpack.c.b16 %v829, %v825
        %v1190 = vpack.c.b16 %v830, %v826
        %v1191 = vpack.c.b16 %v831, %v827
        %v1192 = vpack.c.b16 %v836, %v832
        %v1193 = vpack.c.b16 %v837, %v833
        %v1194 = vpack.c.b16 %v838, %v834
        %v1195 = vpack.c.b16 %v839, %v835
        %v1196 = vpack.c.b16 %v844, %v840
        %v1197 = vpack.c.b16 %v845, %v841
        %v1198 = vpack.c.b16 %v846, %v842
        %v1199 = vpack.c.b16 %v847, %v843
        %v1200 = vpack.c.b16 %v852, %v848
        %v1201 = vpack.c.b16 %v853, %v849
        %v1202 = vpack.c.b16 %v854, %v850
        %v1203 = vpack.c.b16 %v855, %v851
        %v1204 = vpack.c.b16 %v860, %v856
        %v1205 = vpack.c.b16 %v861, %v857
        %v1206 = vpack.c.b16 %v862, %v858
        %v1207 = vpack.c.b16 %v863, %v859
        %v1208 = vpack.c.b16 %v868, %v864
        %v1209 = vpack.c.b16 %v869, %v865
        %v1210 = vpack.c.b16 %v870, %v866
        %v1211 = vpack.c.b16 %v871, %v867
        %v1212 = vpack.c.b16 %v876, %v872
        %v1213 = vpack.c.b16 %v877, %v873
        %v1214 = vpack.c.b16 %v878, %v874
        %v1215 = vpack.c.b16 %v879, %v875
        %v1216 = vpack.c.b16 %v884, %v880
        %v1217 = vpack.c.b16 %v885, %v881
        %v1218 = vpack.c.b16 %v886, %v882
        %v1219 = vpack.c.b16 %v887, %v883
        %v1220 = vpack.c.b16 %v892, %v888
        %v1221 = vpack.c.b16 %v893, %v889
        %v1222 = vpack.c.b16 %v894, %v890
        %v1223 = vpack.c.b16 %v895, %v891
        %v1224 = vpack.c.b16 %v900, %v896
        %v1225 = vpack.c.b16 %v901, %v897
        %v1226 = vpack.c.b16 %v902, %v898
        %v1227 = vpack.c.b16 %v903, %v899
        %v1228 = vpack.c.b16 %v908, %v904
        %v1229 = vpack.c.b16 %v909, %v905
        %v1230 = vpack.c.b16 %v910, %v906
        %v1231 = vpack.c.b16 %v911, %v907
        %v1232 = vpack.c.b16 %v916, %v912
        %v1233 = vpack.c.b16 %v917, %v913
        %v1234 = vpack.c.b16 %v918, %v914
        %v1235 = vpack.c.b16 %v919, %v915
        %v1236 = vpack.c.b16 %v924, %v920
        %v1237 = vpack.c.b16 %v925, %v921
        %v1238 = vpack.c.b16 %v926, %v922
        %v1239 = vpack.c.b16 %v927, %v923
        %v1240 = vpack.c.b16 %v932, %v928
        %v1241 = vpack.c.b16 %v933, %v929
        %v1242 = vpack.c.b16 %v934, %v930
        %v1243 = vpack.c.b16 %v935, %v931
        %v1244 = vpack.c.b16 %v940, %v936
        %v1245 = vpack.c.b16 %v941, %v937
        %v1246 = vpack.c.b16 %v942, %v938
        %v1247 = vpack.c.b16 %v943, %v939
        %v1248 = vpack.c.b16 %v948, %v944
        %v1249 = vpack.c.b16 %v949, %v945
        %v1250 = vpack.c.b16 %v950, %v946
        %v1251 = vpack.c.b16 %v951, %v947
        %v1252 = vpack.c.b16 %v956, %v952
        %v1253 = vpack.c.b16 %v957, %v953
        %v1254 = vpack.c.b16 %v958, %v954
        %v1255 = vpack.c.b16 %v959, %v955
        %v1256 = vpack.c.b16 %v964, %v960
        %v1257 = vpack.c.b16 %v965, %v961
        %v1258 = vpack.c.b16 %v966, %v962
        %v1259 = vpack.c.b16 %v967, %v963
        %v1260 = vpack.c.b16 %v972, %v968
        %v1261 = vpack.c.b16 %v973, %v969
        %v1262 = vpack.c.b16 %v974, %v970
        %v1263 = vpack.c.b16 %v975, %v971
        %v1264 = vpack.c.b16 %v980, %v976
        %v1265 = vpack.c.b16 %v981, %v977
        %v1266 = vpack.c.b16 %v982, %v978
        %v1267 = vpack.c.b16 %v983, %v979
        %v1268 = vpack.c.b16 %v988, %v984
        %v1269 = vpack.c.b16 %v989, %v985
        %v1270 = vpack.c.b16 %v990, %v986
        %v1271 = vpack.c.b16 %v991, %v987
        %v1272 = vpack.c.b16 %v996, %v992
        %v1273 = vpack.c.b16 %v997, %v993
        %v1274 = vpack.c.b16 %v998, %v994
        %v1275 = vpack.c.b16 %v999, %v995
        %v1276 = vpack.c.b16 %v1004, %v1000
        %v1277 = vpack.c.b16 %v1005, %v1001
        %v1278 = vpack.c.b16 %v1006, %v1002
        %v1279 = vpack.c.b16 %v1007, %v1003
        %v1280 = vpack.c.b16 %v1012, %v1008
        %v1281 = vpack.c.b16 %v1013, %v1009
        %v1282 = vpack.c.b16 %v1014, %v1010
        %v1283 = vpack.c.b16 %v1015, %v1011
        %v1284 = vpack.c.b16 %v1020, %v1016
        %v1285 = vpack.c.b16 %v1021, %v1017
        %v1286 = vpack.c.b16 %v1022, %v1018
        %v1287 = vpack.c.b16 %v1023, %v1019
        %v1288 = vpack.c.b16 %v1028, %v1024
        %v1289 = vpack.c.b16 %v1029, %v1025
        %v1290 = vpack.c.b16 %v1030, %v1026
        %v1291 = vpack.c.b16 %v1031, %v1027
        %v1292 = vpack.c.b16 %v1036, %v1032
        %v1293 = vpack.c.b16 %v1037, %v1033
        %v1294 = vpack.c.b16 %v1038, %v1034
        %v1295 = vpack.c.b16 %v1039, %v1035
        %v1296 = vpack.c.b16 %v1044, %v1040
        %v1297 = vpack.c.b16 %v1045, %v1041
        %v1298 = vpack.c.b16 %v1046, %v1042
        %v1299 = vpack.c.b16 %v1047, %v1043
        %v1300 = vpack.c.b16 %v1052, %v1048
        %v1301 = vpack.c.b16 %v1053, %v1049
        %v1302 = vpack.c.b16 %v1054, %v1050
        %v1303 = vpack.c.b16 %v1055, %v1051
        %v1304 = vpack.c.b16 %v1060, %v1056
        %v1305 = vpack.c.b16 %v1061, %v1057
        %v1306 = vpack.c.b16 %v1062, %v1058
        %v1307 = vpack.c.b16 %v1063, %v1059
        %v1308 = vpack.c.b16 %v1068, %v1064
        %v1309 = vpack.c.b16 %v1069, %v1065
        %v1310 = vpack.c.b16 %v1070, %v1066
        %v1311 = vpack.c.b16 %v1071, %v1067
        %v1312 = vpack.c.b16 %v1076, %v1072
        %v1313 = vpack.c.b16 %v1077, %v1073
        %v1314 = vpack.c.b16 %v1078, %v1074
        %v1315 = vpack.c.b16 %v1079, %v1075
        %v1316 = vpack.c.b16 %v1084, %v1080
        %v1317 = vpack.c.b16 %v1085, %v1081
        %v1318 = vpack.c.b16 %v1086, %v1082
        %v1319 = vpack.c.b16 %v1087, %v1083
        %v1320 = vpack.c.b16 %v1092, %v1088
        %v1321 = vpack.c.b16 %v1093, %v1089
        %v1322 = vpack.c.b16 %v1094, %v1090
        %v1323 = vpack.c.b16 %v1095, %v1091
        %v1324 = vpack.c.b16 %v1100, %v1096
        %v1325 = vpack.c.b16 %v1101, %v1097
        %v1326 = vpack.c.b16 %v1102, %v1098
        %v1327 = vpack.c.b16 %v1103, %v1099
        %v1328 = vpack.c.b16 %v1108, %v1104
        %v1329 = vpack.c.b16 %v1109, %v1105
        %v1330 = vpack.c.b16 %v1110, %v1106
        %v1331 = vpack.c.b16 %v1111, %v1107
        %v1332 = vpack.c.b16 %v1116, %v1112
        %v1333 = vpack.c.b16 %v1117, %v1113
        %v1334 = vpack.c.b16 %v1118, %v1114
        %v1335 = vpack.c.b16 %v1119, %v1115
        %v1336 = vpack.c.b16 %v1124, %v1120
        %v1337 = vpack.c.b16 %v1125, %v1121
        %v1338 = vpack.c.b16 %v1126, %v1122
        %v1339 = vpack.c.b16 %v1127, %v1123
        %v1340 = vpack.c.b16 %v1132, %v1128
        %v1341 = vpack.c.b16 %v1133, %v1129
        %v1342 = vpack.c.b16 %v1134, %v1130
        %v1343 = vpack.c.b16 %v1135, %v1131
        %v1344 = vpack.c.b16 %v1140, %v1136
        %v1345 = vpack.c.b16 %v1141, %v1137
        %v1346 = vpack.c.b16 %v1142, %v1138
        %v1347 = vpack.c.b16 %v1143, %v1139
        %v1348 = vpack.c.b16 %v1148, %v1144
        %v1349 = vpack.c.b16 %v1149, %v1145
        %v1350 = vpack.c.b16 %v1150, %v1146
        %v1351 = vpack.c.b16 %v1151, %v1147
        %v1352 = vpack.c.b16 %v1156, %v1152
        %v1353 = vpack.c.b16 %v1157, %v1153
        %v1354 = vpack.c.b16 %v1158, %v1154
        %v1355 = vpack.c.b16 %v1159, %v1155
        %vm1552 = vcmask 130048
        %v1554 = vsel %vm1552, %v353, 0
        %1556 = vmatprep.subr.bf16.mxu0 %v1161
        %1557 = vmatpush1.bf16.msra.mxu0 %v1160
        %1558 = vmatprep.subr.bf16.mxu0 %v1165
        %1559 = vmatpush1.bf16.msra.mxu0 %v1164
        %1560 = vmatprep.subr.bf16.mxu0 %v1169
        %1561 = vmatpush1.bf16.msra.mxu0 %v1168
        %1562 = vmatprep.subr.bf16.mxu0 %v1173
        %1563 = vmatpush1.bf16.msra.mxu0 %v1172
        %1564 = vmatprep.subr.bf16.mxu0 %v1177
        %1565 = vmatpush1.bf16.msra.mxu0 %v1176
        %1566 = vmatprep.subr.bf16.mxu0 %v1181
        %1567 = vmatpush1.bf16.msra.mxu0 %v1180
        %1568 = vmatprep.subr.bf16.mxu0 %v1185
        %1569 = vmatpush1.bf16.msra.mxu0 %v1184
        %1570 = vmatprep.subr.bf16.mxu0 %v1189
        %1571 = vmatpush1.bf16.msra.mxu0 %v1188
        %1572 = vmatprep.subr.bf16.mxu0 %v1193
        %1573 = vmatpush1.bf16.msra.mxu0 %v1192
        %1574 = vmatprep.subr.bf16.mxu0 %v1197
        %1575 = vmatpush1.bf16.msra.mxu0 %v1196
        %1576 = vmatprep.subr.bf16.mxu0 %v1201
        %1577 = vmatpush1.bf16.msra.mxu0 %v1200
        %1578 = vmatprep.subr.bf16.mxu0 %v1205
        %1579 = vmatpush1.bf16.msra.mxu0 %v1204
        %1580 = vmatprep.subr.bf16.mxu0 %v1209
        %1581 = vmatpush1.bf16.msra.mxu0 %v1208
        %1582 = vmatprep.subr.bf16.mxu0 %v1213
        %1583 = vmatpush1.bf16.msra.mxu0 %v1212
        %1584 = vmatprep.subr.bf16.mxu0 %v1217
        %1585 = vmatpush1.bf16.msra.mxu0 %v1216
        %1586 = vmatprep.subr.bf16.mxu0 %v1221
        %1587 = vmatpush1.bf16.msra.mxu0 %v1220
        %1588 = vmatprep.mubr.bf16.mxu0 %v348
        %1589 = vmatmul.mubr.bf16.gmra.mrb[0].mxu0 %v347
        %v1590 = vpop.f32.mrb[0].mxu0
        %v1591 = vadd.f32 %v555, %v1590
        %v1592 = vpop.f32.mrb[0].mxu0
        %v1593 = vadd.f32 %v559, %v1592
        %v1594 = vpop.f32.mrb[0].mxu0
        %v1595 = vpop.f32.mrb[0].mxu0
        %1596 = vdwg.mxu0
        %1597 = vmatprep.subr.bf16.mxu0 %v1225
        %1598 = vmatpush1.bf16.msra.mxu0 %v1224
        %1599 = vmatprep.subr.bf16.mxu0 %v1229
        %1600 = vmatpush1.bf16.msra.mxu0 %v1228
        %1601 = vmatprep.subr.bf16.mxu0 %v1233
        %1602 = vmatpush1.bf16.msra.mxu0 %v1232
        %1603 = vmatprep.subr.bf16.mxu0 %v1237
        %1604 = vmatpush1.bf16.msra.mxu0 %v1236
        %1605 = vmatprep.subr.bf16.mxu0 %v1241
        %1606 = vmatpush1.bf16.msra.mxu0 %v1240
        %1607 = vmatprep.subr.bf16.mxu0 %v1245
        %1608 = vmatpush1.bf16.msra.mxu0 %v1244
        %1609 = vmatprep.subr.bf16.mxu0 %v1249
        %1610 = vmatpush1.bf16.msra.mxu0 %v1248
        %1611 = vmatprep.subr.bf16.mxu0 %v1253
        %1612 = vmatpush1.bf16.msra.mxu0 %v1252
        %1613 = vmatprep.subr.bf16.mxu0 %v1257
        %1614 = vmatpush1.bf16.msra.mxu0 %v1256
        %1615 = vmatprep.subr.bf16.mxu0 %v1261
        %1616 = vmatpush1.bf16.msra.mxu0 %v1260
        %1617 = vmatprep.subr.bf16.mxu0 %v1265
        %1618 = vmatpush1.bf16.msra.mxu0 %v1264
        %1619 = vmatprep.subr.bf16.mxu0 %v1269
        %1620 = vmatpush1.bf16.msra.mxu0 %v1268
        %1621 = vmatprep.subr.bf16.mxu0 %v1273
        %1622 = vmatpush1.bf16.msra.mxu0 %v1272
        %1623 = vmatprep.subr.bf16.mxu0 %v1277
        %1624 = vmatpush1.bf16.msra.mxu0 %v1276
        %1625 = vmatprep.subr.bf16.mxu0 %v1281
        %1626 = vmatpush1.bf16.msra.mxu0 %v1280
        %1627 = vmatprep.subr.bf16.mxu0 %v1285
        %1628 = vmatpush1.bf16.msra.mxu0 %v1284
        %1629 = vmatprep.mubr.bf16.mxu0 %v350
        %1630 = vmatmul.mubr.bf16.gmra.mrb[0].mxu0 %v349
        %v1631 = vpop.f32.mrb[0].mxu0
        %v1632 = vadd.f32 %v1591, %v1631
        %v1633 = vpop.f32.mrb[0].mxu0
        %v1634 = vadd.f32 %v1593, %v1633
        %v1635 = vpop.f32.mrb[0].mxu0
        %v1636 = vpop.f32.mrb[0].mxu0
        %1637 = vdwg.mxu0
        %1638 = vmatprep.subr.bf16.mxu0 %v1289
        %1639 = vmatpush1.bf16.msra.mxu0 %v1288
        %1640 = vmatprep.subr.bf16.mxu0 %v1293
        %1641 = vmatpush1.bf16.msra.mxu0 %v1292
        %1642 = vmatprep.subr.bf16.mxu0 %v1297
        %1643 = vmatpush1.bf16.msra.mxu0 %v1296
        %1644 = vmatprep.subr.bf16.mxu0 %v1301
        %1645 = vmatpush1.bf16.msra.mxu0 %v1300
        %1646 = vmatprep.subr.bf16.mxu0 %v1305
        %1647 = vmatpush1.bf16.msra.mxu0 %v1304
        %1648 = vmatprep.subr.bf16.mxu0 %v1309
        %1649 = vmatpush1.bf16.msra.mxu0 %v1308
        %1650 = vmatprep.subr.bf16.mxu0 %v1313
        %1651 = vmatpush1.bf16.msra.mxu0 %v1312
        %1652 = vmatprep.subr.bf16.mxu0 %v1317
        %1653 = vmatpush1.bf16.msra.mxu0 %v1316
        %1654 = vmatprep.subr.bf16.mxu0 %v1321
        %1655 = vmatpush1.bf16.msra.mxu0 %v1320
        %1656 = vmatprep.subr.bf16.mxu0 %v1325
        %1657 = vmatpush1.bf16.msra.mxu0 %v1324
        %1658 = vmatprep.subr.bf16.mxu0 %v1329
        %1659 = vmatpush1.bf16.msra.mxu0 %v1328
        %1660 = vmatprep.subr.bf16.mxu0 %v1333
        %1661 = vmatpush1.bf16.msra.mxu0 %v1332
        %1662 = vmatprep.subr.bf16.mxu0 %v1337
        %1663 = vmatpush1.bf16.msra.mxu0 %v1336
        %1664 = vmatprep.subr.bf16.mxu0 %v1341
        %1665 = vmatpush1.bf16.msra.mxu0 %v1340
        %1666 = vmatprep.subr.bf16.mxu0 %v1345
        %1667 = vmatpush1.bf16.msra.mxu0 %v1344
        %1668 = vmatprep.subr.bf16.mxu0 %v1349
        %1669 = vmatpush1.bf16.msra.mxu0 %v1348
        %1670 = vmatprep.mubr.bf16.mxu0 %v352
        %1671 = vmatmul.mubr.bf16.gmra.mrb[0].mxu0 %v351
        %v1672 = vpop.f32.mrb[0].mxu0
        %v1673 = vadd.f32 %v1632, %v1672
        %v1674 = vpop.f32.mrb[0].mxu0
        %v1675 = vadd.f32 %v1634, %v1674
        %v1676 = vpop.f32.mrb[0].mxu0
        %v1677 = vpop.f32.mrb[0].mxu0
        %1678 = vdwg.mxu0
        %1679 = vmatprep.subr.bf16.mxu0 %v1353
        %1680 = vmatpush1.bf16.msra.mxu0 %v1352
        %1681 = vmatprep.subr.bf16.mxu0 0
        %1682 = vmatpush1.bf16.msra.mxu0 0
        %1683 = vmatprep.subr.bf16.mxu0 0
        %1684 = vmatpush1.bf16.msra.mxu0 0
        %1685 = vmatprep.subr.bf16.mxu0 0
        %1686 = vmatpush1.bf16.msra.mxu0 0
        %1687 = vmatprep.subr.bf16.mxu0 0
        %1688 = vmatpush1.bf16.msra.mxu0 0
        %1689 = vmatprep.subr.bf16.mxu0 0
        %1690 = vmatpush1.bf16.msra.mxu0 0
        %1691 = vmatprep.subr.bf16.mxu0 0
        %1692 = vmatpush1.bf16.msra.mxu0 0
        %1693 = vmatprep.subr.bf16.mxu0 0
        %1694 = vmatpush1.bf16.msra.mxu0 0
        %1695 = vmatprep.subr.bf16.mxu0 0
        %1696 = vmatpush1.bf16.msra.mxu0 0
        %1697 = vmatprep.subr.bf16.mxu0 0
        %1698 = vmatpush1.bf16.msra.mxu0 0
        %1699 = vmatprep.subr.bf16.mxu0 0
        %1700 = vmatpush1.bf16.msra.mxu0 0
        %1701 = vmatprep.subr.bf16.mxu0 0
        %1702 = vmatpush1.bf16.msra.mxu0 0
        %1703 = vmatprep.subr.bf16.mxu0 0
        %1704 = vmatpush1.bf16.msra.mxu0 0
        %1705 = vmatprep.subr.bf16.mxu0 0
        %1706 = vmatpush1.bf16.msra.mxu0 0
        %1707 = vmatprep.subr.bf16.mxu0 0
        %1708 = vmatpush1.bf16.msra.mxu0 0
        %1709 = vmatprep.subr.bf16.mxu0 0
        %1710 = vmatpush1.bf16.msra.mxu0 0
        %1711 = vmatprep.mubr.bf16.mxu0 0
        %1712 = vmatmul.mubr.bf16.gmra.mrb[0].mxu0 %v1554
        %v1713 = vpop.f32.mrb[0].mxu0
        %v1714 = vadd.f32 %v1673, %v1713
        %v1715 = vpop.f32.mrb[0].mxu0
        %v1716 = vadd.f32 %v1675, %v1715
        %v1717 = vpop.f32.mrb[0].mxu0
        %v1718 = vpop.f32.mrb[0].mxu0
        %1719 = vdwg.mxu0
        %1720 = vmatprep.subr.bf16.mxu0 %v1163
        %1721 = vmatpush1.bf16.msra.mxu0 %v1162
        %1722 = vmatprep.subr.bf16.mxu0 %v1167
        %1723 = vmatpush1.bf16.msra.mxu0 %v1166
        %1724 = vmatprep.subr.bf16.mxu0 %v1171
        %1725 = vmatpush1.bf16.msra.mxu0 %v1170
        %1726 = vmatprep.subr.bf16.mxu0 %v1175
        %1727 = vmatpush1.bf16.msra.mxu0 %v1174
        %1728 = vmatprep.subr.bf16.mxu0 %v1179
        %1729 = vmatpush1.bf16.msra.mxu0 %v1178
        %1730 = vmatprep.subr.bf16.mxu0 %v1183
        %1731 = vmatpush1.bf16.msra.mxu0 %v1182
        %1732 = vmatprep.subr.bf16.mxu0 %v1187
        %1733 = vmatpush1.bf16.msra.mxu0 %v1186
        %1734 = vmatprep.subr.bf16.mxu0 %v1191
        %1735 = vmatpush1.bf16.msra.mxu0 %v1190
        %1736 = vmatprep.subr.bf16.mxu0 %v1195
        %1737 = vmatpush1.bf16.msra.mxu0 %v1194
        %1738 = vmatprep.subr.bf16.mxu0 %v1199
        %1739 = vmatpush1.bf16.msra.mxu0 %v1198
        %1740 = vmatprep.subr.bf16.mxu0 %v1203
        %1741 = vmatpush1.bf16.msra.mxu0 %v1202
        %1742 = vmatprep.subr.bf16.mxu0 %v1207
        %1743 = vmatpush1.bf16.msra.mxu0 %v1206
        %1744 = vmatprep.subr.bf16.mxu0 %v1211
        %1745 = vmatpush1.bf16.msra.mxu0 %v1210
        %1746 = vmatprep.subr.bf16.mxu0 %v1215
        %1747 = vmatpush1.bf16.msra.mxu0 %v1214
        %1748 = vmatprep.subr.bf16.mxu0 %v1219
        %1749 = vmatpush1.bf16.msra.mxu0 %v1218
        %1750 = vmatprep.subr.bf16.mxu0 %v1223
        %1751 = vmatpush1.bf16.msra.mxu0 %v1222
        %1752 = vmatprep.mubr.bf16.mxu0 %v348
        %1753 = vmatmul.mubr.bf16.gmra.mrb[0].mxu0 %v347
        %v1754 = vpop.f32.mrb[0].mxu0
        %v1755 = vadd.f32 %v563, %v1754
        %v1756 = vpop.f32.mrb[0].mxu0
        %v1757 = vadd.f32 %v567, %v1756
        %v1758 = vpop.f32.mrb[0].mxu0
        %v1759 = vpop.f32.mrb[0].mxu0
        %1760 = vdwg.mxu0
        %1761 = vmatprep.subr.bf16.mxu0 %v1227
        %1762 = vmatpush1.bf16.msra.mxu0 %v1226
        %1763 = vmatprep.subr.bf16.mxu0 %v1231
        %1764 = vmatpush1.bf16.msra.mxu0 %v1230
        %1765 = vmatprep.subr.bf16.mxu0 %v1235
        %1766 = vmatpush1.bf16.msra.mxu0 %v1234
        %1767 = vmatprep.subr.bf16.mxu0 %v1239
        %1768 = vmatpush1.bf16.msra.mxu0 %v1238
        %1769 = vmatprep.subr.bf16.mxu0 %v1243
        %1770 = vmatpush1.bf16.msra.mxu0 %v1242
        %1771 = vmatprep.subr.bf16.mxu0 %v1247
        %1772 = vmatpush1.bf16.msra.mxu0 %v1246
        %1773 = vmatprep.subr.bf16.mxu0 %v1251
        %1774 = vmatpush1.bf16.msra.mxu0 %v1250
        %1775 = vmatprep.subr.bf16.mxu0 %v1255
        %1776 = vmatpush1.bf16.msra.mxu0 %v1254
        %1777 = vmatprep.subr.bf16.mxu0 %v1259
        %1778 = vmatpush1.bf16.msra.mxu0 %v1258
        %1779 = vmatprep.subr.bf16.mxu0 %v1263
        %1780 = vmatpush1.bf16.msra.mxu0 %v1262
        %1781 = vmatprep.subr.bf16.mxu0 %v1267
        %1782 = vmatpush1.bf16.msra.mxu0 %v1266
        %1783 = vmatprep.subr.bf16.mxu0 %v1271
        %1784 = vmatpush1.bf16.msra.mxu0 %v1270
        %1785 = vmatprep.subr.bf16.mxu0 %v1275
        %1786 = vmatpush1.bf16.msra.mxu0 %v1274
        %1787 = vmatprep.subr.bf16.mxu0 %v1279
        %1788 = vmatpush1.bf16.msra.mxu0 %v1278
        %1789 = vmatprep.subr.bf16.mxu0 %v1283
        %1790 = vmatpush1.bf16.msra.mxu0 %v1282
        %1791 = vmatprep.subr.bf16.mxu0 %v1287
        %1792 = vmatpush1.bf16.msra.mxu0 %v1286
        %1793 = vmatprep.mubr.bf16.mxu0 %v350
        %1794 = vmatmul.mubr.bf16.gmra.mrb[0].mxu0 %v349
        %v1795 = vpop.f32.mrb[0].mxu0
        %v1796 = vadd.f32 %v1755, %v1795
        %v1797 = vpop.f32.mrb[0].mxu0
        %v1798 = vadd.f32 %v1757, %v1797
        %v1799 = vpop.f32.mrb[0].mxu0
        %v1800 = vpop.f32.mrb[0].mxu0
        %1801 = vdwg.mxu0
        %1802 = vmatprep.subr.bf16.mxu0 %v1291
        %1803 = vmatpush1.bf16.msra.mxu0 %v1290
        %1804 = vmatprep.subr.bf16.mxu0 %v1295
        %1805 = vmatpush1.bf16.msra.mxu0 %v1294
        %1806 = vmatprep.subr.bf16.mxu0 %v1299
        %1807 = vmatpush1.bf16.msra.mxu0 %v1298
        %1808 = vmatprep.subr.bf16.mxu0 %v1303
        %1809 = vmatpush1.bf16.msra.mxu0 %v1302
        %1810 = vmatprep.subr.bf16.mxu0 %v1307
        %1811 = vmatpush1.bf16.msra.mxu0 %v1306
        %1812 = vmatprep.subr.bf16.mxu0 %v1311
        %1813 = vmatpush1.bf16.msra.mxu0 %v1310
        %1814 = vmatprep.subr.bf16.mxu0 %v1315
        %1815 = vmatpush1.bf16.msra.mxu0 %v1314
        %1816 = vmatprep.subr.bf16.mxu0 %v1319
        %1817 = vmatpush1.bf16.msra.mxu0 %v1318
        %1818 = vmatprep.subr.bf16.mxu0 %v1323
        %1819 = vmatpush1.bf16.msra.mxu0 %v1322
        %1820 = vmatprep.subr.bf16.mxu0 %v1327
        %1821 = vmatpush1.bf16.msra.mxu0 %v1326
        %1822 = vmatprep.subr.bf16.mxu0 %v1331
        %1823 = vmatpush1.bf16.msra.mxu0 %v1330
        %1824 = vmatprep.subr.bf16.mxu0 %v1335
        %1825 = vmatpush1.bf16.msra.mxu0 %v1334
        %1826 = vmatprep.subr.bf16.mxu0 %v1339
        %1827 = vmatpush1.bf16.msra.mxu0 %v1338
        %1828 = vmatprep.subr.bf16.mxu0 %v1343
        %1829 = vmatpush1.bf16.msra.mxu0 %v1342
        %1830 = vmatprep.subr.bf16.mxu0 %v1347
        %1831 = vmatpush1.bf16.msra.mxu0 %v1346
        %1832 = vmatprep.subr.bf16.mxu0 %v1351
        %1833 = vmatpush1.bf16.msra.mxu0 %v1350
        %1834 = vmatprep.mubr.bf16.mxu0 %v352
        %1835 = vmatmul.mubr.bf16.gmra.mrb[0].mxu0 %v351
        %v1836 = vpop.f32.mrb[0].mxu0
        %v1837 = vadd.f32 %v1796, %v1836
        %v1838 = vpop.f32.mrb[0].mxu0
        %v1839 = vadd.f32 %v1798, %v1838
        %v1840 = vpop.f32.mrb[0].mxu0
        %v1841 = vpop.f32.mrb[0].mxu0
        %1842 = vdwg.mxu0
        %1843 = vmatprep.subr.bf16.mxu0 %v1355
        %1844 = vmatpush1.bf16.msra.mxu0 %v1354
        %1845 = vmatprep.subr.bf16.mxu0 0
        %1846 = vmatpush1.bf16.msra.mxu0 0
        %1847 = vmatprep.subr.bf16.mxu0 0
        %1848 = vmatpush1.bf16.msra.mxu0 0
        %1849 = vmatprep.subr.bf16.mxu0 0
        %1850 = vmatpush1.bf16.msra.mxu0 0
        %1851 = vmatprep.subr.bf16.mxu0 0
        %1852 = vmatpush1.bf16.msra.mxu0 0
        %1853 = vmatprep.subr.bf16.mxu0 0
        %1854 = vmatpush1.bf16.msra.mxu0 0
        %1855 = vmatprep.subr.bf16.mxu0 0
        %1856 = vmatpush1.bf16.msra.mxu0 0
        %1857 = vmatprep.subr.bf16.mxu0 0
        %1858 = vmatpush1.bf16.msra.mxu0 0
        %1859 = vmatprep.subr.bf16.mxu0 0
        %1860 = vmatpush1.bf16.msra.mxu0 0
        %1861 = vmatprep.subr.bf16.mxu0 0
        %1862 = vmatpush1.bf16.msra.mxu0 0
        %1863 = vmatprep.subr.bf16.mxu0 0
        %1864 = vmatpush1.bf16.msra.mxu0 0
        %1865 = vmatprep.subr.bf16.mxu0 0
        %1866 = vmatpush1.bf16.msra.mxu0 0
        %1867 = vmatprep.subr.bf16.mxu0 0
        %1868 = vmatpush1.bf16.msra.mxu0 0
        %1869 = vmatprep.subr.bf16.mxu0 0
        %1870 = vmatpush1.bf16.msra.mxu0 0
        %1871 = vmatprep.subr.bf16.mxu0 0
        %1872 = vmatpush1.bf16.msra.mxu0 0
        %1873 = vmatprep.subr.bf16.mxu0 0
        %1874 = vmatpush1.bf16.msra.mxu0 0
        %1875 = vmatprep.mubr.bf16.mxu0 0
        %1876 = vmatmul.mubr.bf16.gmra.mrb[0].mxu0 %v1554
        %v1877 = vpop.f32.mrb[0].mxu0
        %v1878 = vadd.f32 %v1837, %v1877
        %v1879 = vpop.f32.mrb[0].mxu0
        %v1880 = vadd.f32 %v1839, %v1879
        %v1881 = vpop.f32.mrb[0].mxu0
        %v1882 = vpop.f32.mrb[0].mxu0
        %1883 = vdwg.mxu0
        %v1884 = vmax.f32 %v1714, 0.0
        %v1885 = vmax.f32 %v1716, 0.0
        %v1886 = vmax.f32 %v1878, 0.0
        %v1887 = vmax.f32 %v1880, 0.0
        %v1888 = vpack.c.bf16 %v1884, %v1884
        %v1889 = vpack.c.bf16 %v1885, %v1885
        %v1890 = vpack.c.bf16 %v1886, %v1886
        %v1891 = vpack.c.bf16 %v1887, %v1887
        %v1892 = vld [vmem:[#allocation7] sm:$0xff]
        %v1893 = vld [vmem:[#allocation7 + $0x8] sm:$0xff]
        %v1894 = vld [vmem:[#allocation7 + $0x10] sm:$0xff]
        %v1895 = vld [vmem:[#allocation7 + $0x18] sm:$0xff]
        %v1896 = vld [vmem:[#allocation7 + $0x20] sm:$0xff]
        %v1897 = vld [vmem:[#allocation7 + $0x28] sm:$0xff]
        %v1898 = vld [vmem:[#allocation7 + $0x30] sm:$0xff]
        %v1899 = vld [vmem:[#allocation7 + $0x38] sm:$0xff]
        %v1900 = vld [vmem:[#allocation7 + $0x40] sm:$0xff]
        %v1901 = vld [vmem:[#allocation7 + $0x48] sm:$0xff]
        %v1902 = vld [vmem:[#allocation7 + $0x50] sm:$0xff]
        %v1903 = vld [vmem:[#allocation7 + $0x58] sm:$0xff]
        %v1904 = vld [vmem:[#allocation7 + $0x60] sm:$0xff]
        %v1905 = vld [vmem:[#allocation7 + $0x68] sm:$0xff]
        %v1906 = vld [vmem:[#allocation7 + $0x70] sm:$0xff]
        %v1907 = vld [vmem:[#allocation7 + $0x78] sm:$0xff]
        %v1908 = vld [vmem:[#allocation7 + $0x80] sm:$0xff]
        %v1909 = vld [vmem:[#allocation7 + $0x88] sm:$0xff]
        %v1910 = vld [vmem:[#allocation7 + $0x90] sm:$0xff]
        %v1911 = vld [vmem:[#allocation7 + $0x98] sm:$0xff]
        %v1912 = vld [vmem:[#allocation7 + $0xa0] sm:$0xff]
        %v1913 = vld [vmem:[#allocation7 + $0xa8] sm:$0xff]
        %v1914 = vld [vmem:[#allocation7 + $0xb0] sm:$0xff]
        %v1915 = vld [vmem:[#allocation7 + $0xb8] sm:$0xff]
        %v1916 = vld [vmem:[#allocation7 + $0xc0] sm:$0xff]
        %v1917 = vld [vmem:[#allocation7 + $0xc8] sm:$0xff]
        %v1918 = vld [vmem:[#allocation7 + $0xd0] sm:$0xff]
        %v1919 = vld [vmem:[#allocation7 + $0xd8] sm:$0xff]
        %v1920 = vld [vmem:[#allocation7 + $0xe0] sm:$0xff]
        %v1921 = vld [vmem:[#allocation7 + $0xe8] sm:$0xff]
        %v1922 = vld [vmem:[#allocation7 + $0xf0] sm:$0xff]
        %v1923 = vld [vmem:[#allocation7 + $0xf8] sm:$0xff]
        %v1924 = vld [vmem:[#allocation7 + $0x100] sm:$0xff]
        %v1925 = vld [vmem:[#allocation7 + $0x108] sm:$0xff]
        %v1926 = vld [vmem:[#allocation7 + $0x110] sm:$0xff]
        %v1927 = vld [vmem:[#allocation7 + $0x118] sm:$0xff]
        %v1928 = vld [vmem:[#allocation7 + $0x120] sm:$0xff]
        %v1929 = vld [vmem:[#allocation7 + $0x128] sm:$0xff]
        %v1930 = vld [vmem:[#allocation7 + $0x130] sm:$0xff]
        %v1931 = vld [vmem:[#allocation7 + $0x138] sm:$0xff]
        %v1932 = vld [vmem:[#allocation7 + $0x140] sm:$0xff]
        %v1933 = vld [vmem:[#allocation7 + $0x148] sm:$0xff]
        %v1934 = vld [vmem:[#allocation7 + $0x150] sm:$0xff]
        %v1935 = vld [vmem:[#allocation7 + $0x158] sm:$0xff]
        %v1936 = vld [vmem:[#allocation7 + $0x160] sm:$0xff]
        %v1937 = vld [vmem:[#allocation7 + $0x168] sm:$0xff]
        %v1938 = vld [vmem:[#allocation7 + $0x170] sm:$0xff]
        %v1939 = vld [vmem:[#allocation7 + $0x178] sm:$0xff]
        %v1940 = vld [vmem:[#allocation7 + $0x180] sm:$0xff]
        %v1941 = vld [vmem:[#allocation7 + $0x188] sm:$0xff]
        %v1942 = vld [vmem:[#allocation7 + $0x190] sm:$0xff]
        %v1943 = vld [vmem:[#allocation7 + $0x198] sm:$0xff]
        %v1944 = vld [vmem:[#allocation7 + $0x1a0] sm:$0xff]
        %v1945 = vld [vmem:[#allocation7 + $0x1a8] sm:$0xff]
        %v1946 = vld [vmem:[#allocation7 + $0x1b0] sm:$0xff]
        %v1947 = vld [vmem:[#allocation7 + $0x1b8] sm:$0xff]
        %v1948 = vld [vmem:[#allocation7 + $0x1c0] sm:$0xff]
        %v1949 = vld [vmem:[#allocation7 + $0x1c8] sm:$0xff]
        %v1950 = vld [vmem:[#allocation7 + $0x1d0] sm:$0xff]
        %v1951 = vld [vmem:[#allocation7 + $0x1d8] sm:$0xff]
        %v1952 = vld [vmem:[#allocation7 + $0x1e0] sm:$0xff]
        %v1953 = vld [vmem:[#allocation7 + $0x1e8] sm:$0xff]
        %v1954 = vld [vmem:[#allocation7 + $0x1f0] sm:$0xff]
        %v1955 = vld [vmem:[#allocation7 + $0x1f8] sm:$0xff]
        %v1956 = vld [vmem:[#allocation7 + $0x200] sm:$0xff]
        %v1957 = vld [vmem:[#allocation7 + $0x208] sm:$0xff]
        %v1958 = vld [vmem:[#allocation7 + $0x210] sm:$0xff]
        %v1959 = vld [vmem:[#allocation7 + $0x218] sm:$0xff]
        %v1960 = vld [vmem:[#allocation7 + $0x220] sm:$0xff]
        %v1961 = vld [vmem:[#allocation7 + $0x228] sm:$0xff]
        %v1962 = vld [vmem:[#allocation7 + $0x230] sm:$0xff]
        %v1963 = vld [vmem:[#allocation7 + $0x238] sm:$0xff]
        %v1964 = vld [vmem:[#allocation7 + $0x240] sm:$0xff]
        %v1965 = vld [vmem:[#allocation7 + $0x248] sm:$0xff]
        %v1966 = vld [vmem:[#allocation7 + $0x250] sm:$0xff]
        %v1967 = vld [vmem:[#allocation7 + $0x258] sm:$0xff]
        %v1968 = vld [vmem:[#allocation7 + $0x260] sm:$0xff]
        %v1969 = vld [vmem:[#allocation7 + $0x268] sm:$0xff]
        %v1970 = vld [vmem:[#allocation7 + $0x270] sm:$0xff]
        %v1971 = vld [vmem:[#allocation7 + $0x278] sm:$0xff]
        %v1972 = vld [vmem:[#allocation7 + $0x280] sm:$0xff]
        %v1973 = vld [vmem:[#allocation7 + $0x288] sm:$0xff]
        %v1974 = vld [vmem:[#allocation7 + $0x290] sm:$0xff]
        %v1975 = vld [vmem:[#allocation7 + $0x298] sm:$0xff]
        %v1976 = vld [vmem:[#allocation7 + $0x2a0] sm:$0xff]
        %v1977 = vld [vmem:[#allocation7 + $0x2a8] sm:$0xff]
        %v1978 = vld [vmem:[#allocation7 + $0x2b0] sm:$0xff]
        %v1979 = vld [vmem:[#allocation7 + $0x2b8] sm:$0xff]
        %v1980 = vld [vmem:[#allocation7 + $0x2c0] sm:$0xff]
        %v1981 = vld [vmem:[#allocation7 + $0x2c8] sm:$0xff]
        %v1982 = vld [vmem:[#allocation7 + $0x2d0] sm:$0xff]
        %v1983 = vld [vmem:[#allocation7 + $0x2d8] sm:$0xff]
        %v1984 = vld [vmem:[#allocation7 + $0x2e0] sm:$0xff]
        %v1985 = vld [vmem:[#allocation7 + $0x2e8] sm:$0xff]
        %v1986 = vld [vmem:[#allocation7 + $0x2f0] sm:$0xff]
        %v1987 = vld [vmem:[#allocation7 + $0x2f8] sm:$0xff]
        %v1988 = vld [vmem:[#allocation7 + $0x300] sm:$0xff]
        %v1989 = vld [vmem:[#allocation7 + $0x308] sm:$0xff]
        %v1990 = vld [vmem:[#allocation7 + $0x310] sm:$0xff]
        %v1991 = vld [vmem:[#allocation7 + $0x318] sm:$0xff]
        %v1992 = vld [vmem:[#allocation7 + $0x320] sm:$0xff]
        %v1993 = vld [vmem:[#allocation7 + $0x328] sm:$0xff]
        %v1994 = vld [vmem:[#allocation7 + $0x330] sm:$0xff]
        %v1995 = vld [vmem:[#allocation7 + $0x338] sm:$0xff]
        %v1996 = vld [vmem:[#allocation7 + $0x340] sm:$0xff]
        %v1997 = vld [vmem:[#allocation7 + $0x348] sm:$0xff]
        %v1998 = vld [vmem:[#allocation7 + $0x350] sm:$0xff]
        %v1999 = vld [vmem:[#allocation7 + $0x358] sm:$0xff]
        %v2000 = vld [vmem:[#allocation7 + $0x360] sm:$0xff]
        %v2001 = vld [vmem:[#allocation7 + $0x368] sm:$0xff]
        %v2002 = vld [vmem:[#allocation7 + $0x370] sm:$0xff]
        %v2003 = vld [vmem:[#allocation7 + $0x378] sm:$0xff]
        %v2004 = vld [vmem:[#allocation7 + $0x380] sm:$0xff]
        %v2005 = vld [vmem:[#allocation7 + $0x388] sm:$0xff]
        %v2006 = vld [vmem:[#allocation7 + $0x390] sm:$0xff]
        %v2007 = vld [vmem:[#allocation7 + $0x398] sm:$0xff]
        %v2008 = vld [vmem:[#allocation7 + $0x3a0] sm:$0xff]
        %v2009 = vld [vmem:[#allocation7 + $0x3a8] sm:$0xff]
        %v2010 = vld [vmem:[#allocation7 + $0x3b0] sm:$0xff]
        %v2011 = vld [vmem:[#allocation7 + $0x3b8] sm:$0xff]
        %v2012 = vld [vmem:[#allocation7 + $0x3c0] sm:$0xff]
        %v2013 = vld [vmem:[#allocation7 + $0x3c8] sm:$0xff]
        %v2014 = vld [vmem:[#allocation7 + $0x3d0] sm:$0xff]
        %v2015 = vld [vmem:[#allocation7 + $0x3d8] sm:$0xff]
        %v2016 = vld [vmem:[#allocation7 + $0x3e0] sm:$0xff]
        %v2017 = vld [vmem:[#allocation7 + $0x3e8] sm:$0xff]
        %v2018 = vld [vmem:[#allocation7 + $0x3f0] sm:$0xff]
        %v2019 = vld [vmem:[#allocation7 + $0x3f8] sm:$0xff]
        %v2020 = vld [vmem:[%s4] sm:$0xf]
        %v2022 = vlaneseq
        %v2023 = vshrl.u32 %v2022, 7
        %v2024 = vsub.s32 0, %v2023
        %v2025 = vrot.slane %v2020, %v2024
        %v2026 = vlaneseq
        %v2027 = vshrl.u32 %v2026, 7
        %v2028 = vsub.s32 1, %v2027
        %v2029 = vrot.slane %v2020, %v2028
        %v2030 = vlaneseq
        %v2031 = vshrl.u32 %v2030, 7
        %v2032 = vsub.s32 2, %v2031
        %v2033 = vrot.slane %v2020, %v2032
        %v2034 = vlaneseq
        %v2035 = vshrl.u32 %v2034, 7
        %v2036 = vsub.s32 3, %v2035
        %v2037 = vrot.slane %v2020, %v2036
        %v2170 = vunpack.c.l.b16 %v1892
        %v2171 = vunpack.c.h.b16 %v1892
        %v2172 = vunpack.c.l.b16 %v1893
        %v2173 = vunpack.c.h.b16 %v1893
        %v2174 = vunpack.c.l.b16 %v1894
        %v2175 = vunpack.c.h.b16 %v1894
        %v2176 = vunpack.c.l.b16 %v1895
        %v2177 = vunpack.c.h.b16 %v1895
        %v2178 = vunpack.c.l.b16 %v1896
        %v2179 = vunpack.c.h.b16 %v1896
        %v2180 = vunpack.c.l.b16 %v1897
        %v2181 = vunpack.c.h.b16 %v1897
        %v2182 = vunpack.c.l.b16 %v1898
        %v2183 = vunpack.c.h.b16 %v1898
        %v2184 = vunpack.c.l.b16 %v1899
        %v2185 = vunpack.c.h.b16 %v1899
        %v2186 = vunpack.c.l.b16 %v1900
        %v2187 = vunpack.c.h.b16 %v1900
        %v2188 = vunpack.c.l.b16 %v1901
        %v2189 = vunpack.c.h.b16 %v1901
        %v2190 = vunpack.c.l.b16 %v1902
        %v2191 = vunpack.c.h.b16 %v1902
        %v2192 = vunpack.c.l.b16 %v1903
        %v2193 = vunpack.c.h.b16 %v1903
        %v2194 = vunpack.c.l.b16 %v1904
        %v2195 = vunpack.c.h.b16 %v1904
        %v2196 = vunpack.c.l.b16 %v1905
        %v2197 = vunpack.c.h.b16 %v1905
        %v2198 = vunpack.c.l.b16 %v1906
        %v2199 = vunpack.c.h.b16 %v1906
        %v2200 = vunpack.c.l.b16 %v1907
        %v2201 = vunpack.c.h.b16 %v1907
        %v2202 = vunpack.c.l.b16 %v1908
        %v2203 = vunpack.c.h.b16 %v1908
        %v2204 = vunpack.c.l.b16 %v1909
        %v2205 = vunpack.c.h.b16 %v1909
        %v2206 = vunpack.c.l.b16 %v1910
        %v2207 = vunpack.c.h.b16 %v1910
        %v2208 = vunpack.c.l.b16 %v1911
        %v2209 = vunpack.c.h.b16 %v1911
        %v2210 = vunpack.c.l.b16 %v1912
        %v2211 = vunpack.c.h.b16 %v1912
        %v2212 = vunpack.c.l.b16 %v1913
        %v2213 = vunpack.c.h.b16 %v1913
        %v2214 = vunpack.c.l.b16 %v1914
        %v2215 = vunpack.c.h.b16 %v1914
        %v2216 = vunpack.c.l.b16 %v1915
        %v2217 = vunpack.c.h.b16 %v1915
        %v2218 = vunpack.c.l.b16 %v1916
        %v2219 = vunpack.c.h.b16 %v1916
        %v2220 = vunpack.c.l.b16 %v1917
        %v2221 = vunpack.c.h.b16 %v1917
        %v2222 = vunpack.c.l.b16 %v1918
        %v2223 = vunpack.c.h.b16 %v1918
        %v2224 = vunpack.c.l.b16 %v1919
        %v2225 = vunpack.c.h.b16 %v1919
        %v2226 = vunpack.c.l.b16 %v1920
        %v2227 = vunpack.c.h.b16 %v1920
        %v2228 = vunpack.c.l.b16 %v1921
        %v2229 = vunpack.c.h.b16 %v1921
        %v2230 = vunpack.c.l.b16 %v1922
        %v2231 = vunpack.c.h.b16 %v1922
        %v2232 = vunpack.c.l.b16 %v1923
        %v2233 = vunpack.c.h.b16 %v1923
        %v2234 = vunpack.c.l.b16 %v1924
        %v2235 = vunpack.c.h.b16 %v1924
        %v2236 = vunpack.c.l.b16 %v1925
        %v2237 = vunpack.c.h.b16 %v1925
        %v2238 = vunpack.c.l.b16 %v1926
        %v2239 = vunpack.c.h.b16 %v1926
        %v2240 = vunpack.c.l.b16 %v1927
        %v2241 = vunpack.c.h.b16 %v1927
        %v2242 = vunpack.c.l.b16 %v1928
        %v2243 = vunpack.c.h.b16 %v1928
        %v2244 = vunpack.c.l.b16 %v1929
        %v2245 = vunpack.c.h.b16 %v1929
        %v2246 = vunpack.c.l.b16 %v1930
        %v2247 = vunpack.c.h.b16 %v1930
        %v2248 = vunpack.c.l.b16 %v1931
        %v2249 = vunpack.c.h.b16 %v1931
        %v2250 = vunpack.c.l.b16 %v1932
        %v2251 = vunpack.c.h.b16 %v1932
        %v2252 = vunpack.c.l.b16 %v1933
        %v2253 = vunpack.c.h.b16 %v1933
        %v2254 = vunpack.c.l.b16 %v1934
        %v2255 = vunpack.c.h.b16 %v1934
        %v2256 = vunpack.c.l.b16 %v1935
        %v2257 = vunpack.c.h.b16 %v1935
        %v2258 = vunpack.c.l.b16 %v1936
        %v2259 = vunpack.c.h.b16 %v1936
        %v2260 = vunpack.c.l.b16 %v1937
        %v2261 = vunpack.c.h.b16 %v1937
        %v2262 = vunpack.c.l.b16 %v1938
        %v2263 = vunpack.c.h.b16 %v1938
        %v2264 = vunpack.c.l.b16 %v1939
        %v2265 = vunpack.c.h.b16 %v1939
        %v2266 = vunpack.c.l.b16 %v1940
        %v2267 = vunpack.c.h.b16 %v1940
        %v2268 = vunpack.c.l.b16 %v1941
        %v2269 = vunpack.c.h.b16 %v1941
        %v2270 = vunpack.c.l.b16 %v1942
        %v2271 = vunpack.c.h.b16 %v1942
        %v2272 = vunpack.c.l.b16 %v1943
        %v2273 = vunpack.c.h.b16 %v1943
        %v2274 = vunpack.c.l.b16 %v1944
        %v2275 = vunpack.c.h.b16 %v1944
        %v2276 = vunpack.c.l.b16 %v1945
        %v2277 = vunpack.c.h.b16 %v1945
        %v2278 = vunpack.c.l.b16 %v1946
        %v2279 = vunpack.c.h.b16 %v1946
        %v2280 = vunpack.c.l.b16 %v1947
        %v2281 = vunpack.c.h.b16 %v1947
        %v2282 = vunpack.c.l.b16 %v1948
        %v2283 = vunpack.c.h.b16 %v1948
        %v2284 = vunpack.c.l.b16 %v1949
        %v2285 = vunpack.c.h.b16 %v1949
        %v2286 = vunpack.c.l.b16 %v1950
        %v2287 = vunpack.c.h.b16 %v1950
        %v2288 = vunpack.c.l.b16 %v1951
        %v2289 = vunpack.c.h.b16 %v1951
        %v2290 = vunpack.c.l.b16 %v1952
        %v2291 = vunpack.c.h.b16 %v1952
        %v2292 = vunpack.c.l.b16 %v1953
        %v2293 = vunpack.c.h.b16 %v1953
        %v2294 = vunpack.c.l.b16 %v1954
        %v2295 = vunpack.c.h.b16 %v1954
        %v2296 = vunpack.c.l.b16 %v1955
        %v2297 = vunpack.c.h.b16 %v1955
        %v2298 = vunpack.c.l.b16 %v1956
        %v2299 = vunpack.c.h.b16 %v1956
        %v2300 = vunpack.c.l.b16 %v1957
        %v2301 = vunpack.c.h.b16 %v1957
        %v2302 = vunpack.c.l.b16 %v1958
        %v2303 = vunpack.c.h.b16 %v1958
        %v2304 = vunpack.c.l.b16 %v1959
        %v2305 = vunpack.c.h.b16 %v1959
        %v2306 = vunpack.c.l.b16 %v1960
        %v2307 = vunpack.c.h.b16 %v1960
        %v2308 = vunpack.c.l.b16 %v1961
        %v2309 = vunpack.c.h.b16 %v1961
        %v2310 = vunpack.c.l.b16 %v1962
        %v2311 = vunpack.c.h.b16 %v1962
        %v2312 = vunpack.c.l.b16 %v1963
        %v2313 = vunpack.c.h.b16 %v1963
        %v2314 = vunpack.c.l.b16 %v1964
        %v2315 = vunpack.c.h.b16 %v1964
        %v2316 = vunpack.c.l.b16 %v1965
        %v2317 = vunpack.c.h.b16 %v1965
        %v2318 = vunpack.c.l.b16 %v1966
        %v2319 = vunpack.c.h.b16 %v1966
        %v2320 = vunpack.c.l.b16 %v1967
        %v2321 = vunpack.c.h.b16 %v1967
        %v2322 = vunpack.c.l.b16 %v1968
        %v2323 = vunpack.c.h.b16 %v1968
        %v2324 = vunpack.c.l.b16 %v1969
        %v2325 = vunpack.c.h.b16 %v1969
        %v2326 = vunpack.c.l.b16 %v1970
        %v2327 = vunpack.c.h.b16 %v1970
        %v2328 = vunpack.c.l.b16 %v1971
        %v2329 = vunpack.c.h.b16 %v1971
        %v2330 = vunpack.c.l.b16 %v1972
        %v2331 = vunpack.c.h.b16 %v1972
        %v2332 = vunpack.c.l.b16 %v1973
        %v2333 = vunpack.c.h.b16 %v1973
        %v2334 = vunpack.c.l.b16 %v1974
        %v2335 = vunpack.c.h.b16 %v1974
        %v2336 = vunpack.c.l.b16 %v1975
        %v2337 = vunpack.c.h.b16 %v1975
        %v2338 = vunpack.c.l.b16 %v1976
        %v2339 = vunpack.c.h.b16 %v1976
        %v2340 = vunpack.c.l.b16 %v1977
        %v2341 = vunpack.c.h.b16 %v1977
        %v2342 = vunpack.c.l.b16 %v1978
        %v2343 = vunpack.c.h.b16 %v1978
        %v2344 = vunpack.c.l.b16 %v1979
        %v2345 = vunpack.c.h.b16 %v1979
        %v2346 = vunpack.c.l.b16 %v1980
        %v2347 = vunpack.c.h.b16 %v1980
        %v2348 = vunpack.c.l.b16 %v1981
        %v2349 = vunpack.c.h.b16 %v1981
        %v2350 = vunpack.c.l.b16 %v1982
        %v2351 = vunpack.c.h.b16 %v1982
        %v2352 = vunpack.c.l.b16 %v1983
        %v2353 = vunpack.c.h.b16 %v1983
        %v2354 = vunpack.c.l.b16 %v1984
        %v2355 = vunpack.c.h.b16 %v1984
        %v2356 = vunpack.c.l.b16 %v1985
        %v2357 = vunpack.c.h.b16 %v1985
        %v2358 = vunpack.c.l.b16 %v1986
        %v2359 = vunpack.c.h.b16 %v1986
        %v2360 = vunpack.c.l.b16 %v1987
        %v2361 = vunpack.c.h.b16 %v1987
        %v2362 = vunpack.c.l.b16 %v1988
        %v2363 = vunpack.c.h.b16 %v1988
        %v2364 = vunpack.c.l.b16 %v1989
        %v2365 = vunpack.c.h.b16 %v1989
        %v2366 = vunpack.c.l.b16 %v1990
        %v2367 = vunpack.c.h.b16 %v1990
        %v2368 = vunpack.c.l.b16 %v1991
        %v2369 = vunpack.c.h.b16 %v1991
        %v2370 = vunpack.c.l.b16 %v1992
        %v2371 = vunpack.c.h.b16 %v1992
        %v2372 = vunpack.c.l.b16 %v1993
        %v2373 = vunpack.c.h.b16 %v1993
        %v2374 = vunpack.c.l.b16 %v1994
        %v2375 = vunpack.c.h.b16 %v1994
        %v2376 = vunpack.c.l.b16 %v1995
        %v2377 = vunpack.c.h.b16 %v1995
        %v2378 = vunpack.c.l.b16 %v1996
        %v2379 = vunpack.c.h.b16 %v1996
        %v2380 = vunpack.c.l.b16 %v1997
        %v2381 = vunpack.c.h.b16 %v1997
        %v2382 = vunpack.c.l.b16 %v1998
        %v2383 = vunpack.c.h.b16 %v1998
        %v2384 = vunpack.c.l.b16 %v1999
        %v2385 = vunpack.c.h.b16 %v1999
        %v2386 = vunpack.c.l.b16 %v2000
        %v2387 = vunpack.c.h.b16 %v2000
        %v2388 = vunpack.c.l.b16 %v2001
        %v2389 = vunpack.c.h.b16 %v2001
        %v2390 = vunpack.c.l.b16 %v2002
        %v2391 = vunpack.c.h.b16 %v2002
        %v2392 = vunpack.c.l.b16 %v2003
        %v2393 = vunpack.c.h.b16 %v2003
        %v2394 = vunpack.c.l.b16 %v2004
        %v2395 = vunpack.c.h.b16 %v2004
        %v2396 = vunpack.c.l.b16 %v2005
        %v2397 = vunpack.c.h.b16 %v2005
        %v2398 = vunpack.c.l.b16 %v2006
        %v2399 = vunpack.c.h.b16 %v2006
        %v2400 = vunpack.c.l.b16 %v2007
        %v2401 = vunpack.c.h.b16 %v2007
        %v2402 = vunpack.c.l.b16 %v2008
        %v2403 = vunpack.c.h.b16 %v2008
        %v2404 = vunpack.c.l.b16 %v2009
        %v2405 = vunpack.c.h.b16 %v2009
        %v2406 = vunpack.c.l.b16 %v2010
        %v2407 = vunpack.c.h.b16 %v2010
        %v2408 = vunpack.c.l.b16 %v2011
        %v2409 = vunpack.c.h.b16 %v2011
        %v2410 = vunpack.c.l.b16 %v2012
        %v2411 = vunpack.c.h.b16 %v2012
        %v2412 = vunpack.c.l.b16 %v2013
        %v2413 = vunpack.c.h.b16 %v2013
        %v2414 = vunpack.c.l.b16 %v2014
        %v2415 = vunpack.c.h.b16 %v2014
        %v2416 = vunpack.c.l.b16 %v2015
        %v2417 = vunpack.c.h.b16 %v2015
        %v2418 = vunpack.c.l.b16 %v2016
        %v2419 = vunpack.c.h.b16 %v2016
        %v2420 = vunpack.c.l.b16 %v2017
        %v2421 = vunpack.c.h.b16 %v2017
        %v2422 = vunpack.c.l.b16 %v2018
        %v2423 = vunpack.c.h.b16 %v2018
        %v2424 = vunpack.c.l.b16 %v2019
        %v2425 = vunpack.c.h.b16 %v2019
        %v2426 = vpack.c.b16 %v2174, %v2170
        %v2427 = vpack.c.b16 %v2175, %v2171
        %v2428 = vpack.c.b16 %v2176, %v2172
        %v2429 = vpack.c.b16 %v2177, %v2173
        %v2430 = vpack.c.b16 %v2182, %v2178
        %v2431 = vpack.c.b16 %v2183, %v2179
        %v2432 = vpack.c.b16 %v2184, %v2180
        %v2433 = vpack.c.b16 %v2185, %v2181
        %v2434 = vpack.c.b16 %v2190, %v2186
        %v2435 = vpack.c.b16 %v2191, %v2187
        %v2436 = vpack.c.b16 %v2192, %v2188
        %v2437 = vpack.c.b16 %v2193, %v2189
        %v2438 = vpack.c.b16 %v2198, %v2194
        %v2439 = vpack.c.b16 %v2199, %v2195
        %v2440 = vpack.c.b16 %v2200, %v2196
        %v2441 = vpack.c.b16 %v2201, %v2197
        %v2442 = vpack.c.b16 %v2206, %v2202
        %v2443 = vpack.c.b16 %v2207, %v2203
        %v2444 = vpack.c.b16 %v2208, %v2204
        %v2445 = vpack.c.b16 %v2209, %v2205
        %v2446 = vpack.c.b16 %v2214, %v2210
        %v2447 = vpack.c.b16 %v2215, %v2211
        %v2448 = vpack.c.b16 %v2216, %v2212
        %v2449 = vpack.c.b16 %v2217, %v2213
        %v2450 = vpack.c.b16 %v2222, %v2218
        %v2451 = vpack.c.b16 %v2223, %v2219
        %v2452 = vpack.c.b16 %v2224, %v2220
        %v2453 = vpack.c.b16 %v2225, %v2221
        %v2454 = vpack.c.b16 %v2230, %v2226
        %v2455 = vpack.c.b16 %v2231, %v2227
        %v2456 = vpack.c.b16 %v2232, %v2228
        %v2457 = vpack.c.b16 %v2233, %v2229
        %v2458 = vpack.c.b16 %v2238, %v2234
        %v2459 = vpack.c.b16 %v2239, %v2235
        %v2460 = vpack.c.b16 %v2240, %v2236
        %v2461 = vpack.c.b16 %v2241, %v2237
        %v2462 = vpack.c.b16 %v2246, %v2242
        %v2463 = vpack.c.b16 %v2247, %v2243
        %v2464 = vpack.c.b16 %v2248, %v2244
        %v2465 = vpack.c.b16 %v2249, %v2245
        %v2466 = vpack.c.b16 %v2254, %v2250
        %v2467 = vpack.c.b16 %v2255, %v2251
        %v2468 = vpack.c.b16 %v2256, %v2252
        %v2469 = vpack.c.b16 %v2257, %v2253
        %v2470 = vpack.c.b16 %v2262, %v2258
        %v2471 = vpack.c.b16 %v2263, %v2259
        %v2472 = vpack.c.b16 %v2264, %v2260
        %v2473 = vpack.c.b16 %v2265, %v2261
        %v2474 = vpack.c.b16 %v2270, %v2266
        %v2475 = vpack.c.b16 %v2271, %v2267
        %v2476 = vpack.c.b16 %v2272, %v2268
        %v2477 = vpack.c.b16 %v2273, %v2269
        %v2478 = vpack.c.b16 %v2278, %v2274
        %v2479 = vpack.c.b16 %v2279, %v2275
        %v2480 = vpack.c.b16 %v2280, %v2276
        %v2481 = vpack.c.b16 %v2281, %v2277
        %v2482 = vpack.c.b16 %v2286, %v2282
        %v2483 = vpack.c.b16 %v2287, %v2283
        %v2484 = vpack.c.b16 %v2288, %v2284
        %v2485 = vpack.c.b16 %v2289, %v2285
        %v2486 = vpack.c.b16 %v2294, %v2290
        %v2487 = vpack.c.b16 %v2295, %v2291
        %v2488 = vpack.c.b16 %v2296, %v2292
        %v2489 = vpack.c.b16 %v2297, %v2293
        %v2490 = vpack.c.b16 %v2302, %v2298
        %v2491 = vpack.c.b16 %v2303, %v2299
        %v2492 = vpack.c.b16 %v2304, %v2300
        %v2493 = vpack.c.b16 %v2305, %v2301
        %v2494 = vpack.c.b16 %v2310, %v2306
        %v2495 = vpack.c.b16 %v2311, %v2307
        %v2496 = vpack.c.b16 %v2312, %v2308
        %v2497 = vpack.c.b16 %v2313, %v2309
        %v2498 = vpack.c.b16 %v2318, %v2314
        %v2499 = vpack.c.b16 %v2319, %v2315
        %v2500 = vpack.c.b16 %v2320, %v2316
        %v2501 = vpack.c.b16 %v2321, %v2317
        %v2502 = vpack.c.b16 %v2326, %v2322
        %v2503 = vpack.c.b16 %v2327, %v2323
        %v2504 = vpack.c.b16 %v2328, %v2324
        %v2505 = vpack.c.b16 %v2329, %v2325
        %v2506 = vpack.c.b16 %v2334, %v2330
        %v2507 = vpack.c.b16 %v2335, %v2331
        %v2508 = vpack.c.b16 %v2336, %v2332
        %v2509 = vpack.c.b16 %v2337, %v2333
        %v2510 = vpack.c.b16 %v2342, %v2338
        %v2511 = vpack.c.b16 %v2343, %v2339
        %v2512 = vpack.c.b16 %v2344, %v2340
        %v2513 = vpack.c.b16 %v2345, %v2341
        %v2514 = vpack.c.b16 %v2350, %v2346
        %v2515 = vpack.c.b16 %v2351, %v2347
        %v2516 = vpack.c.b16 %v2352, %v2348
        %v2517 = vpack.c.b16 %v2353, %v2349
        %v2518 = vpack.c.b16 %v2358, %v2354
        %v2519 = vpack.c.b16 %v2359, %v2355
        %v2520 = vpack.c.b16 %v2360, %v2356
        %v2521 = vpack.c.b16 %v2361, %v2357
        %v2522 = vpack.c.b16 %v2366, %v2362
        %v2523 = vpack.c.b16 %v2367, %v2363
        %v2524 = vpack.c.b16 %v2368, %v2364
        %v2525 = vpack.c.b16 %v2369, %v2365
        %v2526 = vpack.c.b16 %v2374, %v2370
        %v2527 = vpack.c.b16 %v2375, %v2371
        %v2528 = vpack.c.b16 %v2376, %v2372
        %v2529 = vpack.c.b16 %v2377, %v2373
        %v2530 = vpack.c.b16 %v2382, %v2378
        %v2531 = vpack.c.b16 %v2383, %v2379
        %v2532 = vpack.c.b16 %v2384, %v2380
        %v2533 = vpack.c.b16 %v2385, %v2381
        %v2534 = vpack.c.b16 %v2390, %v2386
        %v2535 = vpack.c.b16 %v2391, %v2387
        %v2536 = vpack.c.b16 %v2392, %v2388
        %v2537 = vpack.c.b16 %v2393, %v2389
        %v2538 = vpack.c.b16 %v2398, %v2394
        %v2539 = vpack.c.b16 %v2399, %v2395
        %v2540 = vpack.c.b16 %v2400, %v2396
        %v2541 = vpack.c.b16 %v2401, %v2397
        %v2542 = vpack.c.b16 %v2406, %v2402
        %v2543 = vpack.c.b16 %v2407, %v2403
        %v2544 = vpack.c.b16 %v2408, %v2404
        %v2545 = vpack.c.b16 %v2409, %v2405
        %v2546 = vpack.c.b16 %v2414, %v2410
        %v2547 = vpack.c.b16 %v2415, %v2411
        %v2548 = vpack.c.b16 %v2416, %v2412
        %v2549 = vpack.c.b16 %v2417, %v2413
        %v2550 = vpack.c.b16 %v2422, %v2418
        %v2551 = vpack.c.b16 %v2423, %v2419
        %v2552 = vpack.c.b16 %v2424, %v2420
        %v2553 = vpack.c.b16 %v2425, %v2421
        %2682 = vmatprep.subr.bf16.mxu0 %v2427
        %2683 = vmatpush1.bf16.msra.mxu0 %v2426
        %2684 = vmatprep.subr.bf16.mxu0 %v2431
        %2685 = vmatpush1.bf16.msra.mxu0 %v2430
        %2686 = vmatprep.subr.bf16.mxu0 %v2435
        %2687 = vmatpush1.bf16.msra.mxu0 %v2434
        %2688 = vmatprep.subr.bf16.mxu0 %v2439
        %2689 = vmatpush1.bf16.msra.mxu0 %v2438
        %2690 = vmatprep.subr.bf16.mxu0 %v2443
        %2691 = vmatpush1.bf16.msra.mxu0 %v2442
        %2692 = vmatprep.subr.bf16.mxu0 %v2447
        %2693 = vmatpush1.bf16.msra.mxu0 %v2446
        %2694 = vmatprep.subr.bf16.mxu0 %v2451
        %2695 = vmatpush1.bf16.msra.mxu0 %v2450
        %2696 = vmatprep.subr.bf16.mxu0 %v2455
        %2697 = vmatpush1.bf16.msra.mxu0 %v2454
        %2698 = vmatprep.subr.bf16.mxu0 %v2459
        %2699 = vmatpush1.bf16.msra.mxu0 %v2458
        %2700 = vmatprep.subr.bf16.mxu0 %v2463
        %2701 = vmatpush1.bf16.msra.mxu0 %v2462
        %2702 = vmatprep.subr.bf16.mxu0 %v2467
        %2703 = vmatpush1.bf16.msra.mxu0 %v2466
        %2704 = vmatprep.subr.bf16.mxu0 %v2471
        %2705 = vmatpush1.bf16.msra.mxu0 %v2470
        %2706 = vmatprep.subr.bf16.mxu0 %v2475
        %2707 = vmatpush1.bf16.msra.mxu0 %v2474
        %2708 = vmatprep.subr.bf16.mxu0 %v2479
        %2709 = vmatpush1.bf16.msra.mxu0 %v2478
        %2710 = vmatprep.subr.bf16.mxu0 %v2483
        %2711 = vmatpush1.bf16.msra.mxu0 %v2482
        %2712 = vmatprep.subr.bf16.mxu0 %v2487
        %2713 = vmatpush1.bf16.msra.mxu0 %v2486
        %2714 = vmatprep.mubr.bf16.mxu0 %v1889
        %2715 = vmatmul.mubr.bf16.gmra.mrb[0].mxu0 %v1888
        %v2716 = vpop.f32.mrb[0].mxu0
        %v2717 = vadd.f32 %v2025, %v2716
        %v2718 = vpop.f32.mrb[0].mxu0
        %v2719 = vadd.f32 %v2029, %v2718
        %v2720 = vpop.f32.mrb[0].mxu0
        %v2721 = vpop.f32.mrb[0].mxu0
        %2722 = vdwg.mxu0
        %2723 = vmatprep.subr.bf16.mxu0 %v2491
        %2724 = vmatpush1.bf16.msra.mxu0 %v2490
        %2725 = vmatprep.subr.bf16.mxu0 %v2495
        %2726 = vmatpush1.bf16.msra.mxu0 %v2494
        %2727 = vmatprep.subr.bf16.mxu0 %v2499
        %2728 = vmatpush1.bf16.msra.mxu0 %v2498
        %2729 = vmatprep.subr.bf16.mxu0 %v2503
        %2730 = vmatpush1.bf16.msra.mxu0 %v2502
        %2731 = vmatprep.subr.bf16.mxu0 %v2507
        %2732 = vmatpush1.bf16.msra.mxu0 %v2506
        %2733 = vmatprep.subr.bf16.mxu0 %v2511
        %2734 = vmatpush1.bf16.msra.mxu0 %v2510
        %2735 = vmatprep.subr.bf16.mxu0 %v2515
        %2736 = vmatpush1.bf16.msra.mxu0 %v2514
        %2737 = vmatprep.subr.bf16.mxu0 %v2519
        %2738 = vmatpush1.bf16.msra.mxu0 %v2518
        %2739 = vmatprep.subr.bf16.mxu0 %v2523
        %2740 = vmatpush1.bf16.msra.mxu0 %v2522
        %2741 = vmatprep.subr.bf16.mxu0 %v2527
        %2742 = vmatpush1.bf16.msra.mxu0 %v2526
        %2743 = vmatprep.subr.bf16.mxu0 %v2531
        %2744 = vmatpush1.bf16.msra.mxu0 %v2530
        %2745 = vmatprep.subr.bf16.mxu0 %v2535
        %2746 = vmatpush1.bf16.msra.mxu0 %v2534
        %2747 = vmatprep.subr.bf16.mxu0 %v2539
        %2748 = vmatpush1.bf16.msra.mxu0 %v2538
        %2749 = vmatprep.subr.bf16.mxu0 %v2543
        %2750 = vmatpush1.bf16.msra.mxu0 %v2542
        %2751 = vmatprep.subr.bf16.mxu0 %v2547
        %2752 = vmatpush1.bf16.msra.mxu0 %v2546
        %2753 = vmatprep.subr.bf16.mxu0 %v2551
        %2754 = vmatpush1.bf16.msra.mxu0 %v2550
        %2755 = vmatprep.mubr.bf16.mxu0 %v1891
        %2756 = vmatmul.mubr.bf16.gmra.mrb[0].mxu0 %v1890
        %v2757 = vpop.f32.mrb[0].mxu0
        %v2758 = vadd.f32 %v2717, %v2757
        %v2759 = vpop.f32.mrb[0].mxu0
        %v2760 = vadd.f32 %v2719, %v2759
        %v2761 = vpop.f32.mrb[0].mxu0
        %v2762 = vpop.f32.mrb[0].mxu0
        %2763 = vdwg.mxu0
        %2764 = vmatprep.subr.bf16.mxu0 %v2429
        %2765 = vmatpush1.bf16.msra.mxu0 %v2428
        %2766 = vmatprep.subr.bf16.mxu0 %v2433
        %2767 = vmatpush1.bf16.msra.mxu0 %v2432
        %2768 = vmatprep.subr.bf16.mxu0 %v2437
        %2769 = vmatpush1.bf16.msra.mxu0 %v2436
        %2770 = vmatprep.subr.bf16.mxu0 %v2441
        %2771 = vmatpush1.bf16.msra.mxu0 %v2440
        %2772 = vmatprep.subr.bf16.mxu0 %v2445
        %2773 = vmatpush1.bf16.msra.mxu0 %v2444
        %2774 = vmatprep.subr.bf16.mxu0 %v2449
        %2775 = vmatpush1.bf16.msra.mxu0 %v2448
        %2776 = vmatprep.subr.bf16.mxu0 %v2453
        %2777 = vmatpush1.bf16.msra.mxu0 %v2452
        %2778 = vmatprep.subr.bf16.mxu0 %v2457
        %2779 = vmatpush1.bf16.msra.mxu0 %v2456
        %2780 = vmatprep.subr.bf16.mxu0 %v2461
        %2781 = vmatpush1.bf16.msra.mxu0 %v2460
        %2782 = vmatprep.subr.bf16.mxu0 %v2465
        %2783 = vmatpush1.bf16.msra.mxu0 %v2464
        %2784 = vmatprep.subr.bf16.mxu0 %v2469
        %2785 = vmatpush1.bf16.msra.mxu0 %v2468
        %2786 = vmatprep.subr.bf16.mxu0 %v2473
        %2787 = vmatpush1.bf16.msra.mxu0 %v2472
        %2788 = vmatprep.subr.bf16.mxu0 %v2477
        %2789 = vmatpush1.bf16.msra.mxu0 %v2476
        %2790 = vmatprep.subr.bf16.mxu0 %v2481
        %2791 = vmatpush1.bf16.msra.mxu0 %v2480
        %2792 = vmatprep.subr.bf16.mxu0 %v2485
        %2793 = vmatpush1.bf16.msra.mxu0 %v2484
        %2794 = vmatprep.subr.bf16.mxu0 %v2489
        %2795 = vmatpush1.bf16.msra.mxu0 %v2488
        %2796 = vmatprep.mubr.bf16.mxu0 %v1889
        %2797 = vmatmul.mubr.bf16.gmra.mrb[0].mxu0 %v1888
        %v2798 = vpop.f32.mrb[0].mxu0
        %v2799 = vadd.f32 %v2033, %v2798
        %v2800 = vpop.f32.mrb[0].mxu0
        %v2801 = vadd.f32 %v2037, %v2800
        %v2802 = vpop.f32.mrb[0].mxu0
        %v2803 = vpop.f32.mrb[0].mxu0
        %2804 = vdwg.mxu0
        %2805 = vmatprep.subr.bf16.mxu0 %v2493
        %2806 = vmatpush1.bf16.msra.mxu0 %v2492
        %2807 = vmatprep.subr.bf16.mxu0 %v2497
        %2808 = vmatpush1.bf16.msra.mxu0 %v2496
        %2809 = vmatprep.subr.bf16.mxu0 %v2501
        %2810 = vmatpush1.bf16.msra.mxu0 %v2500
        %2811 = vmatprep.subr.bf16.mxu0 %v2505
        %2812 = vmatpush1.bf16.msra.mxu0 %v2504
        %2813 = vmatprep.subr.bf16.mxu0 %v2509
        %2814 = vmatpush1.bf16.msra.mxu0 %v2508
        %2815 = vmatprep.subr.bf16.mxu0 %v2513
        %2816 = vmatpush1.bf16.msra.mxu0 %v2512
        %2817 = vmatprep.subr.bf16.mxu0 %v2517
        %2818 = vmatpush1.bf16.msra.mxu0 %v2516
        %2819 = vmatprep.subr.bf16.mxu0 %v2521
        %2820 = vmatpush1.bf16.msra.mxu0 %v2520
        %2821 = vmatprep.subr.bf16.mxu0 %v2525
        %2822 = vmatpush1.bf16.msra.mxu0 %v2524
        %2823 = vmatprep.subr.bf16.mxu0 %v2529
        %2824 = vmatpush1.bf16.msra.mxu0 %v2528
        %2825 = vmatprep.subr.bf16.mxu0 %v2533
        %2826 = vmatpush1.bf16.msra.mxu0 %v2532
        %2827 = vmatprep.subr.bf16.mxu0 %v2537
        %2828 = vmatpush1.bf16.msra.mxu0 %v2536
        %2829 = vmatprep.subr.bf16.mxu0 %v2541
        %2830 = vmatpush1.bf16.msra.mxu0 %v2540
        %2831 = vmatprep.subr.bf16.mxu0 %v2545
        %2832 = vmatpush1.bf16.msra.mxu0 %v2544
        %2833 = vmatprep.subr.bf16.mxu0 %v2549
        %2834 = vmatpush1.bf16.msra.mxu0 %v2548
        %2835 = vmatprep.subr.bf16.mxu0 %v2553
        %2836 = vmatpush1.bf16.msra.mxu0 %v2552
        %2837 = vmatprep.mubr.bf16.mxu0 %v1891
        %2838 = vmatmul.mubr.bf16.gmra.mrb[0].mxu0 %v1890
        %v2839 = vpop.f32.mrb[0].mxu0
        %v2840 = vadd.f32 %v2799, %v2839
        %v2841 = vpop.f32.mrb[0].mxu0
        %v2842 = vadd.f32 %v2801, %v2841
        %v2843 = vpop.f32.mrb[0].mxu0
        %v2844 = vpop.f32.mrb[0].mxu0
        %2845 = vdwg.mxu0
        %v2846 = vmax.f32 %v2758, 0.0
        %v2847 = vmax.f32 %v2760, 0.0
        %v2848 = vmax.f32 %v2840, 0.0
        %v2849 = vmax.f32 %v2842, 0.0
        %v2850 = vpack.c.bf16 %v2846, %v2846
        %v2851 = vpack.c.bf16 %v2847, %v2847
        %v2852 = vpack.c.bf16 %v2848, %v2848
        %v2853 = vpack.c.bf16 %v2849, %v2849
        %v2854 = vld [vmem:[#allocation8] sm:$0xf]
        %v2855 = vld [vmem:[#allocation8 + $0x4] sm:$0xf]
        %v2856 = vld [vmem:[#allocation8 + $0x8] sm:$0xf]
        %v2857 = vld [vmem:[#allocation8 + $0xc] sm:$0xf]
        %v2858 = vld [vmem:[#allocation8 + $0x10] sm:$0xf]
        %v2859 = vld [vmem:[#allocation8 + $0x14] sm:$0xf]
        %v2860 = vld [vmem:[#allocation8 + $0x18] sm:$0xf]
        %v2861 = vld [vmem:[#allocation8 + $0x1c] sm:$0xf]
        %v2862 = vld [vmem:[#allocation8 + $0x20] sm:$0xf]
        %v2863 = vld [vmem:[#allocation8 + $0x24] sm:$0xf]
        %v2864 = vld [vmem:[#allocation8 + $0x28] sm:$0xf]
        %v2865 = vld [vmem:[#allocation8 + $0x2c] sm:$0xf]
        %v2866 = vld [vmem:[#allocation8 + $0x30] sm:$0xf]
        %v2867 = vld [vmem:[#allocation8 + $0x34] sm:$0xf]
        %v2868 = vld [vmem:[#allocation8 + $0x38] sm:$0xf]
        %v2869 = vld [vmem:[#allocation8 + $0x3c] sm:$0xf]
        %v2870 = vld [vmem:[#allocation8 + $0x40] sm:$0xf]
        %v2871 = vld [vmem:[#allocation8 + $0x44] sm:$0xf]
        %v2872 = vld [vmem:[#allocation8 + $0x48] sm:$0xf]
        %v2873 = vld [vmem:[#allocation8 + $0x4c] sm:$0xf]
        %v2874 = vld [vmem:[#allocation8 + $0x50] sm:$0xf]
        %v2875 = vld [vmem:[#allocation8 + $0x54] sm:$0xf]
        %v2876 = vld [vmem:[#allocation8 + $0x58] sm:$0xf]
        %v2877 = vld [vmem:[#allocation8 + $0x5c] sm:$0xf]
        %v2878 = vld [vmem:[#allocation8 + $0x60] sm:$0xf]
        %v2879 = vld [vmem:[#allocation8 + $0x64] sm:$0xf]
        %v2880 = vld [vmem:[#allocation8 + $0x68] sm:$0xf]
        %v2881 = vld [vmem:[#allocation8 + $0x6c] sm:$0xf]
        %v2882 = vld [vmem:[#allocation8 + $0x70] sm:$0xf]
        %v2883 = vld [vmem:[#allocation8 + $0x74] sm:$0xf]
        %v2884 = vld [vmem:[#allocation8 + $0x78] sm:$0xf]
        %v2885 = vld [vmem:[#allocation8 + $0x7c] sm:$0xf]
        %v2886 = vld [vmem:[#allocation8 + $0x80] sm:$0xf]
        %v2887 = vld [vmem:[#allocation8 + $0x84] sm:$0xf]
        %v2888 = vld [vmem:[#allocation8 + $0x88] sm:$0xf]
        %v2889 = vld [vmem:[#allocation8 + $0x8c] sm:$0xf]
        %v2890 = vld [vmem:[#allocation8 + $0x90] sm:$0xf]
        %v2891 = vld [vmem:[#allocation8 + $0x94] sm:$0xf]
        %v2892 = vld [vmem:[#allocation8 + $0x98] sm:$0xf]
        %v2893 = vld [vmem:[#allocation8 + $0x9c] sm:$0xf]
        %v2894 = vld [vmem:[#allocation8 + $0xa0] sm:$0xf]
        %v2895 = vld [vmem:[#allocation8 + $0xa4] sm:$0xf]
        %v2896 = vld [vmem:[#allocation8 + $0xa8] sm:$0xf]
        %v2897 = vld [vmem:[#allocation8 + $0xac] sm:$0xf]
        %v2898 = vld [vmem:[#allocation8 + $0xb0] sm:$0xf]
        %v2899 = vld [vmem:[#allocation8 + $0xb4] sm:$0xf]
        %v2900 = vld [vmem:[#allocation8 + $0xb8] sm:$0xf]
        %v2901 = vld [vmem:[#allocation8 + $0xbc] sm:$0xf]
        %v2902 = vld [vmem:[#allocation8 + $0xc0] sm:$0xf]
        %v2903 = vld [vmem:[#allocation8 + $0xc4] sm:$0xf]
        %v2904 = vld [vmem:[#allocation8 + $0xc8] sm:$0xf]
        %v2905 = vld [vmem:[#allocation8 + $0xcc] sm:$0xf]
        %v2906 = vld [vmem:[#allocation8 + $0xd0] sm:$0xf]
        %v2907 = vld [vmem:[#allocation8 + $0xd4] sm:$0xf]
        %v2908 = vld [vmem:[#allocation8 + $0xd8] sm:$0xf]
        %v2909 = vld [vmem:[#allocation8 + $0xdc] sm:$0xf]
        %v2910 = vld [vmem:[#allocation8 + $0xe0] sm:$0xf]
        %v2911 = vld [vmem:[#allocation8 + $0xe4] sm:$0xf]
        %v2912 = vld [vmem:[#allocation8 + $0xe8] sm:$0xf]
        %v2913 = vld [vmem:[#allocation8 + $0xec] sm:$0xf]
        %v2914 = vld [vmem:[#allocation8 + $0xf0] sm:$0xf]
        %v2915 = vld [vmem:[#allocation8 + $0xf4] sm:$0xf]
        %v2916 = vld [vmem:[#allocation8 + $0xf8] sm:$0xf]
        %v2917 = vld [vmem:[#allocation8 + $0xfc] sm:$0xf]
        %v2918 = vld [vmem:[%s6] sm:$0x1]
        %v2920 = vlaneseq
        %v2921 = vshrl.u32 %v2920, 7
        %v2922 = vsub.s32 0, %v2921
        %v2923 = vrot.slane %v2918, %v2922
        %v2989 = vunpack.c.l.b16 %v2854
        %v2990 = vunpack.c.l.b16 %v2855
        %v2991 = vunpack.c.l.b16 %v2856
        %v2992 = vunpack.c.l.b16 %v2857
        %v2993 = vunpack.c.l.b16 %v2858
        %v2994 = vunpack.c.l.b16 %v2859
        %v2995 = vunpack.c.l.b16 %v2860
        %v2996 = vunpack.c.l.b16 %v2861
        %v2997 = vunpack.c.l.b16 %v2862
        %v2998 = vunpack.c.l.b16 %v2863
        %v2999 = vunpack.c.l.b16 %v2864
        %v3000 = vunpack.c.l.b16 %v2865
        %v3001 = vunpack.c.l.b16 %v2866
        %v3002 = vunpack.c.l.b16 %v2867
        %v3003 = vunpack.c.l.b16 %v2868
        %v3004 = vunpack.c.l.b16 %v2869
        %v3005 = vunpack.c.l.b16 %v2870
        %v3006 = vunpack.c.l.b16 %v2871
        %v3007 = vunpack.c.l.b16 %v2872
        %v3008 = vunpack.c.l.b16 %v2873
        %v3009 = vunpack.c.l.b16 %v2874
        %v3010 = vunpack.c.l.b16 %v2875
        %v3011 = vunpack.c.l.b16 %v2876
        %v3012 = vunpack.c.l.b16 %v2877
        %v3013 = vunpack.c.l.b16 %v2878
        %v3014 = vunpack.c.l.b16 %v2879
        %v3015 = vunpack.c.l.b16 %v2880
        %v3016 = vunpack.c.l.b16 %v2881
        %v3017 = vunpack.c.l.b16 %v2882
        %v3018 = vunpack.c.l.b16 %v2883
        %v3019 = vunpack.c.l.b16 %v2884
        %v3020 = vunpack.c.l.b16 %v2885
        %v3021 = vunpack.c.l.b16 %v2886
        %v3022 = vunpack.c.l.b16 %v2887
        %v3023 = vunpack.c.l.b16 %v2888
        %v3024 = vunpack.c.l.b16 %v2889
        %v3025 = vunpack.c.l.b16 %v2890
        %v3026 = vunpack.c.l.b16 %v2891
        %v3027 = vunpack.c.l.b16 %v2892
        %v3028 = vunpack.c.l.b16 %v2893
        %v3029 = vunpack.c.l.b16 %v2894
        %v3030 = vunpack.c.l.b16 %v2895
        %v3031 = vunpack.c.l.b16 %v2896
        %v3032 = vunpack.c.l.b16 %v2897
        %v3033 = vunpack.c.l.b16 %v2898
        %v3034 = vunpack.c.l.b16 %v2899
        %v3035 = vunpack.c.l.b16 %v2900
        %v3036 = vunpack.c.l.b16 %v2901
        %v3037 = vunpack.c.l.b16 %v2902
        %v3038 = vunpack.c.l.b16 %v2903
        %v3039 = vunpack.c.l.b16 %v2904
        %v3040 = vunpack.c.l.b16 %v2905
        %v3041 = vunpack.c.l.b16 %v2906
        %v3042 = vunpack.c.l.b16 %v2907
        %v3043 = vunpack.c.l.b16 %v2908
        %v3044 = vunpack.c.l.b16 %v2909
        %v3045 = vunpack.c.l.b16 %v2910
        %v3046 = vunpack.c.l.b16 %v2911
        %v3047 = vunpack.c.l.b16 %v2912
        %v3048 = vunpack.c.l.b16 %v2913
        %v3049 = vunpack.c.l.b16 %v2914
        %v3050 = vunpack.c.l.b16 %v2915
        %v3051 = vunpack.c.l.b16 %v2916
        %v3052 = vunpack.c.l.b16 %v2917
        %v3053 = vpack.c.b16 %v2990, %v2989
        %v3054 = vpack.c.b16 %v2992, %v2991
        %v3055 = vpack.c.b16 %v2994, %v2993
        %v3056 = vpack.c.b16 %v2996, %v2995
        %v3057 = vpack.c.b16 %v2998, %v2997
        %v3058 = vpack.c.b16 %v3000, %v2999
        %v3059 = vpack.c.b16 %v3002, %v3001
        %v3060 = vpack.c.b16 %v3004, %v3003
        %v3061 = vpack.c.b16 %v3006, %v3005
        %v3062 = vpack.c.b16 %v3008, %v3007
        %v3063 = vpack.c.b16 %v3010, %v3009
        %v3064 = vpack.c.b16 %v3012, %v3011
        %v3065 = vpack.c.b16 %v3014, %v3013
        %v3066 = vpack.c.b16 %v3016, %v3015
        %v3067 = vpack.c.b16 %v3018, %v3017
        %v3068 = vpack.c.b16 %v3020, %v3019
        %v3069 = vpack.c.b16 %v3022, %v3021
        %v3070 = vpack.c.b16 %v3024, %v3023
        %v3071 = vpack.c.b16 %v3026, %v3025
        %v3072 = vpack.c.b16 %v3028, %v3027
        %v3073 = vpack.c.b16 %v3030, %v3029
        %v3074 = vpack.c.b16 %v3032, %v3031
        %v3075 = vpack.c.b16 %v3034, %v3033
        %v3076 = vpack.c.b16 %v3036, %v3035
        %v3077 = vpack.c.b16 %v3038, %v3037
        %v3078 = vpack.c.b16 %v3040, %v3039
        %v3079 = vpack.c.b16 %v3042, %v3041
        %v3080 = vpack.c.b16 %v3044, %v3043
        %v3081 = vpack.c.b16 %v3046, %v3045
        %v3082 = vpack.c.b16 %v3048, %v3047
        %v3083 = vpack.c.b16 %v3050, %v3049
        %v3084 = vpack.c.b16 %v3052, %v3051
        %3117 = vmatprep.subr.bf16.mxu0 0
        %3118 = vmatpush1.bf16.msra.mxu0 %v3053
        %3119 = vmatprep.subr.bf16.mxu0 0
        %3120 = vmatpush1.bf16.msra.mxu0 %v3054
        %3121 = vmatprep.subr.bf16.mxu0 0
        %3122 = vmatpush1.bf16.msra.mxu0 %v3055
        %3123 = vmatprep.subr.bf16.mxu0 0
        %3124 = vmatpush1.bf16.msra.mxu0 %v3056
        %3125 = vmatprep.subr.bf16.mxu0 0
        %3126 = vmatpush1.bf16.msra.mxu0 %v3057
        %3127 = vmatprep.subr.bf16.mxu0 0
        %3128 = vmatpush1.bf16.msra.mxu0 %v3058
        %3129 = vmatprep.subr.bf16.mxu0 0
        %3130 = vmatpush1.bf16.msra.mxu0 %v3059
        %3131 = vmatprep.subr.bf16.mxu0 0
        %3132 = vmatpush1.bf16.msra.mxu0 %v3060
        %3133 = vmatprep.subr.bf16.mxu0 0
        %3134 = vmatpush1.bf16.msra.mxu0 %v3061
        %3135 = vmatprep.subr.bf16.mxu0 0
        %3136 = vmatpush1.bf16.msra.mxu0 %v3062
        %3137 = vmatprep.subr.bf16.mxu0 0
        %3138 = vmatpush1.bf16.msra.mxu0 %v3063
        %3139 = vmatprep.subr.bf16.mxu0 0
        %3140 = vmatpush1.bf16.msra.mxu0 %v3064
        %3141 = vmatprep.subr.bf16.mxu0 0
        %3142 = vmatpush1.bf16.msra.mxu0 %v3065
        %3143 = vmatprep.subr.bf16.mxu0 0
        %3144 = vmatpush1.bf16.msra.mxu0 %v3066
        %3145 = vmatprep.subr.bf16.mxu0 0
        %3146 = vmatpush1.bf16.msra.mxu0 %v3067
        %3147 = vmatprep.subr.bf16.mxu0 0
        %3148 = vmatpush1.bf16.msra.mxu0 %v3068
        %3149 = vmatprep.mubr.bf16.mxu0 %v2851
        %3150 = vmatmul.mubr.bf16.gmra.mrb[0].mxu0 %v2850
        %v3151 = vpop.f32.mrb[0].mxu0
        %v3152 = vadd.f32 %v2923, %v3151
        %v3153 = vpop.f32.mrb[0].mxu0
        %v3154 = vpop.f32.mrb[0].mxu0
        %v3155 = vpop.f32.mrb[0].mxu0
        %3156 = vdwg.mxu0
        %3157 = vmatprep.subr.bf16.mxu0 0
        %3158 = vmatpush1.bf16.msra.mxu0 %v3069
        %3159 = vmatprep.subr.bf16.mxu0 0
        %3160 = vmatpush1.bf16.msra.mxu0 %v3070
        %3161 = vmatprep.subr.bf16.mxu0 0
        %3162 = vmatpush1.bf16.msra.mxu0 %v3071
        %3163 = vmatprep.subr.bf16.mxu0 0
        %3164 = vmatpush1.bf16.msra.mxu0 %v3072
        %3165 = vmatprep.subr.bf16.mxu0 0
        %3166 = vmatpush1.bf16.msra.mxu0 %v3073
        %3167 = vmatprep.subr.bf16.mxu0 0
        %3168 = vmatpush1.bf16.msra.mxu0 %v3074
        %3169 = vmatprep.subr.bf16.mxu0 0
        %3170 = vmatpush1.bf16.msra.mxu0 %v3075
        %3171 = vmatprep.subr.bf16.mxu0 0
        %3172 = vmatpush1.bf16.msra.mxu0 %v3076
        %3173 = vmatprep.subr.bf16.mxu0 0
        %3174 = vmatpush1.bf16.msra.mxu0 %v3077
        %3175 = vmatprep.subr.bf16.mxu0 0
        %3176 = vmatpush1.bf16.msra.mxu0 %v3078
        %3177 = vmatprep.subr.bf16.mxu0 0
        %3178 = vmatpush1.bf16.msra.mxu0 %v3079
        %3179 = vmatprep.subr.bf16.mxu0 0
        %3180 = vmatpush1.bf16.msra.mxu0 %v3080
        %3181 = vmatprep.subr.bf16.mxu0 0
        %3182 = vmatpush1.bf16.msra.mxu0 %v3081
        %3183 = vmatprep.subr.bf16.mxu0 0
        %3184 = vmatpush1.bf16.msra.mxu0 %v3082
        %3185 = vmatprep.subr.bf16.mxu0 0
        %3186 = vmatpush1.bf16.msra.mxu0 %v3083
        %3187 = vmatprep.subr.bf16.mxu0 0
        %3188 = vmatpush1.bf16.msra.mxu0 %v3084
        %3189 = vmatprep.mubr.bf16.mxu0 %v2853
        %3190 = vmatmul.mubr.bf16.gmra.mrb[0].mxu0 %v2852
        %v3191 = vpop.f32.mrb[0].mxu0
        %v3192 = vadd.f32 %v3152, %v3191
        %v3193 = vpop.f32.mrb[0].mxu0
        %v3194 = vpop.f32.mrb[0].mxu0
        %v3195 = vpop.f32.mrb[0].mxu0
        %3196 = vdwg.mxu0
        %3197 = vst [vmem:[%s338] sm:$0xff] %v3192
        %s3198 = sand.u32 %s186, 1
        %s3199 = scalar_lea.sflag [#allocation4], %s3198
        %s3200 = sand.u32 %s186, 1
        %s3201 = smul.addr %s3200, 8
        %s3202 = scalar_lea.vmem [#allocation10], %s3201
        // Predicated region
        $region65: #{tpu_custom_call.1} parent=47 // pred_check
          %p3203 = pneg %p196
        $region66: #{tpu_custom_call.1} parent=47 // pred_check_branch
          %3205 = sbr.rel (%p3203) target = $region68
        $region67: #{tpu_custom_call.1} parent=47 // pred_region
          %s3207 = ssub.s32 128, 128
          %3208 = vsyncadd %s3199, %s3207
          %s3209 = smul.addr %s26, 128
          %s3210 = scalar_lea.hbm %s7, %s3209
          %s3212 = sshll.u32 %s3202, 4
          %s3213 = int_to_ptr.vmem [resolvable:$true] %s3212
          %3215 = dma.vmem_to_hbm [thread:$0]  %s3213, 128, %s3210, %s3199
        $region68: #{tpu_custom_call.1} parent=47 // pred_fallthru
          _
      $region48: #{tpu_custom_call.1} parent=5 // pred_fallthru
        _
      %p3216 = scmp.le.s32.totalorder 2, %s21
      // Predicated region
      $region69: #{tpu_custom_call.1} parent=5 // pred_check
        %p3217 = pneg %p3216
      $region70: #{tpu_custom_call.1} parent=5 // pred_check_branch
        %3219 = sbr.rel (%p3217) target = $region72
      $region71: #{tpu_custom_call.1} parent=5 // pred_region
        %s3220 = ssub.s32 %s21, 2
        // Predicated region
        $region73: #{tpu_custom_call.1} parent=71 // pred_check
          %p3221 = pneg %p202
        $region74: #{tpu_custom_call.1} parent=71 // pred_check_branch
          %3223 = sbr.rel (%p3221) target = $region76
        $region75: #{tpu_custom_call.1} parent=71 // pred_region
          %s3224 = sand.u32 %s187, 1
          %s3225 = scalar_lea.sflag [#allocation4], %s3224
          %s3226 = sand.u32 %s187, 1
          %s3227 = smul.addr %s3226, 8
          %s3228 = scalar_lea.vmem [#allocation10], %s3227
          %3229 = dma.done %s3225, 128
        $region76: #{tpu_custom_call.1} parent=71 // pred_fallthru
          _
      $region72: #{tpu_custom_call.1} parent=5 // pred_fallthru
        _
    $region6: #{tpu_custom_call.1} parent=1 // loop_footer
      %s25 = sadd.s32 1, %s21
    $region7: #{tpu_custom_call.1} parent=1 // loop_footer_branch
      %20 = sbr.rel target = $region3
    $region8: #{tpu_custom_call.1} parent=1 // loop_exit
      _
    %3230 = vsyncpa [#allocation3], 1
    %s3231 = scalar_lea.sflag [#allocation3], 1
    %3232 = vsyncpa %s3231, 1
    %3233 = vsyncpa [#allocation6], 1
    %3234 = vsyncpa [#allocation9], 1
    %3235 = vsyncpa [#allocation4], 1
    %s3236 = scalar_lea.sflag [#allocation4], 1
    %3237 = vsyncpa %s3236, 1

</llo_original>
